<compile_context>
chip_gen: v5e
topology: v5e:2x2
jax: 0.10.0
libtpu: 0.0.40
codegen_flags: <defaults>
</compile_context>

<pallas_src>
import jax
import jax.numpy as jnp
from jax import lax
from jax.experimental import pallas as pl
from jax.experimental.pallas import tpu as pltpu

EPS = 1e-5
NEG_BIG = -1.0e30

# Padded feature widths (lane-friendly).
D_IN = 28 * 28      # 784
D_H1 = 512          # real 500, padded to 512
D_H2 = 256          # already lane-aligned
D_OUT_PAD = 128     # real 10, padded to 128
N_CLASSES = 10
N_H1_REAL = 500


def _bn_affine(h, gamma, beta):
    """Training-mode BatchNorm1d fused into a single affine: h*scale + shift.

    Biased batch variance, eps=1e-5 (matches PyTorch BatchNorm1d forward in training).
    """
    mu = jnp.mean(h, axis=0, keepdims=True)
    var = jnp.maximum(jnp.mean(h * h, axis=0, keepdims=True) - mu * mu, 0.0)
    scale = gamma * lax.rsqrt(var + EPS)
    shift = beta - mu * scale
    return h * scale + shift


def mlp_kernel(x_ref, w1_ref, w2_ref, w3_ref, bn_ref, o_ref):
    x = x_ref[...]                                   # [B, 784] bf16
    bn = bn_ref[...]                                 # [6, 512] f32 packed (gamma, beta) x 3

    g1, be1 = bn[0:1, :D_H1], bn[1:2, :D_H1]
    g2, be2 = bn[2:3, :D_H2], bn[3:4, :D_H2]
    g3, be3 = bn[4:5, :D_OUT_PAD], bn[5:6, :D_OUT_PAD]

    # ---- fc1 + bn1 + f1 (ReLU) ----  (no bias: cancelled by BN mean subtraction)
    h = jnp.dot(x, w1_ref[...], preferred_element_type=jnp.float32)   # [B, 512] f32
    h = _bn_affine(h, g1, be1)
    h = jnp.maximum(h, 0.0)

    # ---- fc2 + bn2 + f2 (tanh) ----
    h = jnp.dot(h.astype(jnp.bfloat16), w2_ref[...],
                preferred_element_type=jnp.float32)                    # [B, 256] f32
    h = _bn_affine(h, g2, be2)
    h = jnp.tanh(h)

    # ---- fc3 + bn3 + f3 (ReLU) ----
    h = jnp.dot(h.astype(jnp.bfloat16), w3_ref[...],
                preferred_element_type=jnp.float32)                    # [B, 128] f32
    h = _bn_affine(h, g3, be3)
    h = jnp.maximum(h, 0.0)

    # ---- log_softmax over the 10 real classes (padded lanes masked out) ----
    col = lax.broadcasted_iota(jnp.int32, h.shape, 1)
    h = jnp.where(col < N_CLASSES, h, NEG_BIG)
    m = jnp.max(h, axis=1, keepdims=True)
    lse = jnp.log(jnp.sum(jnp.exp(h - m), axis=1, keepdims=True)) + m
    o_ref[...] = h - lse                                               # [B, 128] lane-dense store


def mlpnet_modified_forward(x_nchw, params):
    """Flatten NCHW -> [B, 784] and run the whole forward in one Pallas kernel."""
    b = x_nchw.shape[0]
    x2d = x_nchw.reshape(b, D_IN).astype(jnp.bfloat16)

    w1, w2, w3, bn_params = params

    flops = 2 * b * (D_IN * D_H1 + D_H1 * D_H2 + D_H2 * D_OUT_PAD)
    bytes_accessed = (
        x2d.size * 2 + w1.size * 2 + w2.size * 2 + w3.size * 2
        + bn_params.size * 4 + b * D_OUT_PAD * 4
    )
    transcendentals = b * (D_H2 + D_OUT_PAD) + (D_H1 + D_H2 + D_OUT_PAD)

    vmem_spec = pl.BlockSpec(memory_space=pltpu.MemorySpace.VMEM)

    out_padded = pl.pallas_call(
        mlp_kernel,
        out_shape=jax.ShapeDtypeStruct((b, D_OUT_PAD), jnp.float32),
        in_specs=[vmem_spec] * 5,
        out_specs=vmem_spec,
        cost_estimate=pl.CostEstimate(
            flops=flops,
            transcendentals=transcendentals,
            bytes_accessed=bytes_accessed,
        ),
    )(x2d, w1, w2, w3, bn_params)

    return out_padded[:, :N_CLASSES]


def init_params(key):
    """Deterministic init mimicking PyTorch nn.Linear defaults (U[-1/sqrt(fan_in), ...]).

    Weights are stored pre-transposed [in, out], zero-padded to lane-friendly widths,
    and cast to bf16. Linear biases are omitted (cancelled by training-mode BatchNorm).
    BatchNorm gamma=1 / beta=0 on real features, gamma=0 on padded features so padded
    columns stay exactly zero.
    """
    real_dims = [(D_IN, N_H1_REAL), (N_H1_REAL, D_H2), (D_H2, N_CLASSES)]
    pad_dims = [(D_IN, D_H1), (D_H1, D_H2), (D_H2, D_OUT_PAD)]
    keys = jax.random.split(key, 3)

    weights = []
    bn_rows = []
    for i, ((fin_r, fout_r), (fin_p, fout_p)) in enumerate(zip(real_dims, pad_dims)):
        bound = 1.0 / jnp.sqrt(float(fin_r))
        w_real = jax.random.uniform(keys[i], (fin_r, fout_r), jnp.float32, -bound, bound)
        w = jnp.zeros((fin_p, fout_p), jnp.float32)
        w = w.at[:fin_r, :fout_r].set(w_real)
        weights.append(w.astype(jnp.bfloat16))

        gamma = jnp.zeros((D_H1,), jnp.float32).at[:fout_r].set(1.0)   # padded gamma = 0
        beta = jnp.zeros((D_H1,), jnp.float32)
        bn_rows.extend([gamma, beta])

    bn_params = jnp.stack(bn_rows, axis=0)                              # [6, 512] f32
    return (weights[0], weights[1], weights[2], bn_params)


if __name__ == "__main__":
    key = jax.random.PRNGKey(0)
    k_x, k_p = jax.random.split(key)

    B = 8
    x = jax.random.normal(k_x, (B, 1, 28, 28), jnp.float32)   # MNIST-like NCHW input
    params = init_params(k_p)

    out = mlpnet_modified_forward(x, params)
    out = jax.block_until_ready(out)

    assert out.shape == (B, N_CLASSES)
    assert out.dtype == jnp.float32
    # log_softmax rows should sum to ~1 in probability space
    assert bool(jnp.all(jnp.abs(jnp.sum(jnp.exp(out), axis=1) - 1.0) < 1e-3))

    print("KERNEL_OK")
</pallas_src>

<mosaic_0001>
module attributes {stable_mosaic.version = 11 : i64} {
  func.func @mlp_kernel(%arg0: memref<8x784xbf16, #tpu.memory_space<vmem>>, %arg1: memref<784x512xbf16, #tpu.memory_space<vmem>>, %arg2: memref<512x256xbf16, #tpu.memory_space<vmem>>, %arg3: memref<256x128xbf16, #tpu.memory_space<vmem>>, %arg4: memref<6x512xf32, #tpu.memory_space<vmem>>, %arg5: memref<8x128xf32, #tpu.memory_space<vmem>>) attributes {dimension_semantics = [], scalar_prefetch = 0 : i64, scratch_operands = 0 : i64, tpu.core_type = #tpu.core_type<tc>} {
    %c0 = arith.constant 0 : index
    %c0_0 = arith.constant 0 : index
    %0 = vector.load %arg0[%c0, %c0_0] : memref<8x784xbf16, #tpu.memory_space<vmem>>, vector<8x784xbf16>
    %c0_1 = arith.constant 0 : index
    %c0_2 = arith.constant 0 : index
    %1 = vector.load %arg4[%c0_1, %c0_2] : memref<6x512xf32, #tpu.memory_space<vmem>>, vector<6x512xf32>
    %2 = vector.extract_strided_slice %1 {offsets = [0, 0], sizes = [1, 512], strides = [1, 1]} : vector<6x512xf32> to vector<1x512xf32>
    %3 = vector.extract_strided_slice %1 {offsets = [1, 0], sizes = [1, 512], strides = [1, 1]} : vector<6x512xf32> to vector<1x512xf32>
    %4 = vector.extract_strided_slice %1 {offsets = [2, 0], sizes = [1, 256], strides = [1, 1]} : vector<6x512xf32> to vector<1x256xf32>
    %5 = vector.extract_strided_slice %1 {offsets = [3, 0], sizes = [1, 256], strides = [1, 1]} : vector<6x512xf32> to vector<1x256xf32>
    %6 = vector.extract_strided_slice %1 {offsets = [4, 0], sizes = [1, 128], strides = [1, 1]} : vector<6x512xf32> to vector<1x128xf32>
    %7 = vector.extract_strided_slice %1 {offsets = [5, 0], sizes = [1, 128], strides = [1, 1]} : vector<6x512xf32> to vector<1x128xf32>
    %c0_3 = arith.constant 0 : index
    %c0_4 = arith.constant 0 : index
    %8 = vector.load %arg1[%c0_3, %c0_4] : memref<784x512xbf16, #tpu.memory_space<vmem>>, vector<784x512xbf16>
    %cst = arith.constant dense<0.000000e+00> : vector<8x512xf32>
    %9 = tpu.matmul %0, %8, %cst {dimension_numbers = #tpu.dot_dimension_numbers<[1], [0], [0], [1], [0, 0, 1, 1], [], []>} : vector<8x784xbf16>, vector<784x512xbf16>, vector<8x512xf32> -> vector<8x512xf32>
    %cst_5 = arith.constant dense<0.000000e+00> : vector<512xf32>
    %10 = vector.multi_reduction <add>, %9, %cst_5 [0] : vector<8x512xf32> to vector<512xf32>
    %11 = vector.shape_cast %10 : vector<512xf32> to vector<1x512xf32>
    %cst_6 = arith.constant 8.000000e+00 : f32
    %12 = vector.broadcast %cst_6 : f32 to vector<1x512xf32>
    %13 = arith.divf %11, %12 : vector<1x512xf32>
    %14 = arith.mulf %9, %9 : vector<8x512xf32>
    %cst_7 = arith.constant dense<0.000000e+00> : vector<512xf32>
    %15 = vector.multi_reduction <add>, %14, %cst_7 [0] : vector<8x512xf32> to vector<512xf32>
    %16 = vector.shape_cast %15 : vector<512xf32> to vector<1x512xf32>
    %cst_8 = arith.constant 8.000000e+00 : f32
    %17 = vector.broadcast %cst_8 : f32 to vector<1x512xf32>
    %18 = arith.divf %16, %17 : vector<1x512xf32>
    %19 = arith.mulf %13, %13 : vector<1x512xf32>
    %20 = arith.subf %18, %19 : vector<1x512xf32>
    %cst_9 = arith.constant 0.000000e+00 : f32
    %21 = vector.broadcast %cst_9 : f32 to vector<1x512xf32>
    %22 = arith.maximumf %20, %21 : vector<1x512xf32>
    %cst_10 = arith.constant 9.99999974E-6 : f32
    %23 = vector.broadcast %cst_10 : f32 to vector<1x512xf32>
    %24 = arith.addf %22, %23 : vector<1x512xf32>
    %25 = math.rsqrt %24 : vector<1x512xf32>
    %26 = arith.mulf %2, %25 : vector<1x512xf32>
    %27 = arith.mulf %13, %26 : vector<1x512xf32>
    %28 = arith.subf %3, %27 : vector<1x512xf32>
    %29 = vector.broadcast %26 : vector<1x512xf32> to vector<8x512xf32>
    %30 = arith.mulf %9, %29 : vector<8x512xf32>
    %31 = vector.broadcast %28 : vector<1x512xf32> to vector<8x512xf32>
    %32 = arith.addf %30, %31 : vector<8x512xf32>
    %cst_11 = arith.constant 0.000000e+00 : f32
    %33 = vector.broadcast %cst_11 : f32 to vector<8x512xf32>
    %34 = arith.maximumf %32, %33 : vector<8x512xf32>
    %35 = arith.truncf %34 : vector<8x512xf32> to vector<8x512xbf16>
    %c0_12 = arith.constant 0 : index
    %c0_13 = arith.constant 0 : index
    %36 = vector.load %arg2[%c0_12, %c0_13] : memref<512x256xbf16, #tpu.memory_space<vmem>>, vector<512x256xbf16>
    %cst_14 = arith.constant dense<0.000000e+00> : vector<8x256xf32>
    %37 = tpu.matmul %35, %36, %cst_14 {dimension_numbers = #tpu.dot_dimension_numbers<[1], [0], [0], [1], [0, 0, 1, 1], [], []>} : vector<8x512xbf16>, vector<512x256xbf16>, vector<8x256xf32> -> vector<8x256xf32>
    %cst_15 = arith.constant dense<0.000000e+00> : vector<256xf32>
    %38 = vector.multi_reduction <add>, %37, %cst_15 [0] : vector<8x256xf32> to vector<256xf32>
    %39 = vector.shape_cast %38 : vector<256xf32> to vector<1x256xf32>
    %cst_16 = arith.constant 8.000000e+00 : f32
    %40 = vector.broadcast %cst_16 : f32 to vector<1x256xf32>
    %41 = arith.divf %39, %40 : vector<1x256xf32>
    %42 = arith.mulf %37, %37 : vector<8x256xf32>
    %cst_17 = arith.constant dense<0.000000e+00> : vector<256xf32>
    %43 = vector.multi_reduction <add>, %42, %cst_17 [0] : vector<8x256xf32> to vector<256xf32>
    %44 = vector.shape_cast %43 : vector<256xf32> to vector<1x256xf32>
    %cst_18 = arith.constant 8.000000e+00 : f32
    %45 = vector.broadcast %cst_18 : f32 to vector<1x256xf32>
    %46 = arith.divf %44, %45 : vector<1x256xf32>
    %47 = arith.mulf %41, %41 : vector<1x256xf32>
    %48 = arith.subf %46, %47 : vector<1x256xf32>
    %cst_19 = arith.constant 0.000000e+00 : f32
    %49 = vector.broadcast %cst_19 : f32 to vector<1x256xf32>
    %50 = arith.maximumf %48, %49 : vector<1x256xf32>
    %cst_20 = arith.constant 9.99999974E-6 : f32
    %51 = vector.broadcast %cst_20 : f32 to vector<1x256xf32>
    %52 = arith.addf %50, %51 : vector<1x256xf32>
    %53 = math.rsqrt %52 : vector<1x256xf32>
    %54 = arith.mulf %4, %53 : vector<1x256xf32>
    %55 = arith.mulf %41, %54 : vector<1x256xf32>
    %56 = arith.subf %5, %55 : vector<1x256xf32>
    %57 = vector.broadcast %54 : vector<1x256xf32> to vector<8x256xf32>
    %58 = arith.mulf %37, %57 : vector<8x256xf32>
    %59 = vector.broadcast %56 : vector<1x256xf32> to vector<8x256xf32>
    %60 = arith.addf %58, %59 : vector<8x256xf32>
    %61 = math.tanh %60 : vector<8x256xf32>
    %62 = arith.truncf %61 : vector<8x256xf32> to vector<8x256xbf16>
    %c0_21 = arith.constant 0 : index
    %c0_22 = arith.constant 0 : index
    %63 = vector.load %arg3[%c0_21, %c0_22] : memref<256x128xbf16, #tpu.memory_space<vmem>>, vector<256x128xbf16>
    %cst_23 = arith.constant dense<0.000000e+00> : vector<8x128xf32>
    %64 = tpu.matmul %62, %63, %cst_23 {dimension_numbers = #tpu.dot_dimension_numbers<[1], [0], [0], [1], [0, 0, 1, 1], [], []>} : vector<8x256xbf16>, vector<256x128xbf16>, vector<8x128xf32> -> vector<8x128xf32>
    %cst_24 = arith.constant dense<0.000000e+00> : vector<128xf32>
    %65 = vector.multi_reduction <add>, %64, %cst_24 [0] : vector<8x128xf32> to vector<128xf32>
    %66 = vector.shape_cast %65 : vector<128xf32> to vector<1x128xf32>
    %cst_25 = arith.constant 8.000000e+00 : f32
    %67 = vector.broadcast %cst_25 : f32 to vector<1x128xf32>
    %68 = arith.divf %66, %67 : vector<1x128xf32>
    %69 = arith.mulf %64, %64 : vector<8x128xf32>
    %cst_26 = arith.constant dense<0.000000e+00> : vector<128xf32>
    %70 = vector.multi_reduction <add>, %69, %cst_26 [0] : vector<8x128xf32> to vector<128xf32>
    %71 = vector.shape_cast %70 : vector<128xf32> to vector<1x128xf32>
    %cst_27 = arith.constant 8.000000e+00 : f32
    %72 = vector.broadcast %cst_27 : f32 to vector<1x128xf32>
    %73 = arith.divf %71, %72 : vector<1x128xf32>
    %74 = arith.mulf %68, %68 : vector<1x128xf32>
    %75 = arith.subf %73, %74 : vector<1x128xf32>
    %cst_28 = arith.constant 0.000000e+00 : f32
    %76 = vector.broadcast %cst_28 : f32 to vector<1x128xf32>
    %77 = arith.maximumf %75, %76 : vector<1x128xf32>
    %cst_29 = arith.constant 9.99999974E-6 : f32
    %78 = vector.broadcast %cst_29 : f32 to vector<1x128xf32>
    %79 = arith.addf %77, %78 : vector<1x128xf32>
    %80 = math.rsqrt %79 : vector<1x128xf32>
    %81 = arith.mulf %6, %80 : vector<1x128xf32>
    %82 = arith.mulf %68, %81 : vector<1x128xf32>
    %83 = arith.subf %7, %82 : vector<1x128xf32>
    %84 = vector.broadcast %81 : vector<1x128xf32> to vector<8x128xf32>
    %85 = arith.mulf %64, %84 : vector<8x128xf32>
    %86 = vector.broadcast %83 : vector<1x128xf32> to vector<8x128xf32>
    %87 = arith.addf %85, %86 : vector<8x128xf32>
    %cst_30 = arith.constant 0.000000e+00 : f32
    %88 = vector.broadcast %cst_30 : f32 to vector<8x128xf32>
    %89 = arith.maximumf %87, %88 : vector<8x128xf32>
    %90 = tpu.iota {dimensions = array<i32: 1>} : vector<8x128xi32>
    %c10_i32 = arith.constant 10 : i32
    %91 = vector.broadcast %c10_i32 : i32 to vector<8x128xi32>
    %92 = arith.cmpi slt, %90, %91 : vector<8x128xi32>
    %cst_31 = arith.constant -1.000000e+30 : f32
    %93 = vector.broadcast %cst_31 : f32 to vector<8x128xf32>
    %94 = arith.select %92, %89, %93 : vector<8x128xi1>, vector<8x128xf32>
    %cst_32 = arith.constant dense<0xFF800000> : vector<8xf32>
    %95 = vector.multi_reduction <maximumf>, %94, %cst_32 [1] : vector<8x128xf32> to vector<8xf32>
    %96 = vector.shape_cast %95 : vector<8xf32> to vector<8x1xf32>
    %97 = vector.broadcast %96 : vector<8x1xf32> to vector<8x128xf32>
    %98 = arith.subf %94, %97 : vector<8x128xf32>
    %99 = math.exp %98 : vector<8x128xf32>
    %cst_33 = arith.constant dense<0.000000e+00> : vector<8xf32>
    %100 = vector.multi_reduction <add>, %99, %cst_33 [1] : vector<8x128xf32> to vector<8xf32>
    %101 = vector.shape_cast %100 : vector<8xf32> to vector<8x1xf32>
    %102 = math.log %101 : vector<8x1xf32>
    %103 = arith.addf %102, %96 : vector<8x1xf32>
    %104 = vector.broadcast %103 : vector<8x1xf32> to vector<8x128xf32>
    %105 = arith.subf %94, %104 : vector<8x128xf32>
    %c0_34 = arith.constant 0 : index
    %c0_35 = arith.constant 0 : index
    %106 = vector.load %arg5[%c0_34, %c0_35] : memref<8x128xf32, #tpu.memory_space<vmem>>, vector<8x128xf32>
    tpu.vector_store %arg5[%c0_34, %c0_35], %105 {strides = array<i32>} : memref<8x128xf32, #tpu.memory_space<vmem>>, vector<8x128xf32>,
    return
  }
}

</mosaic_0001>

<llo_original>
// kernel: tpu_custom_call.1
$region0: #{tpu_custom_call.1}
  #allocation0 [shape = 'u32[]', space=smem, size = 0x4, offset = 0x4, fixed_abs, tag = 'smem constant byte address 0x4 - core index']
  #allocation1 [shape = 'u32[72,128]{1,0:T(1,128)}', space=vmem, size = 0x9000, scoped, tag = 'internal scratch']
  %s0 = inlined_call_operand.hbm [shape: bf16[8,784], index: 0, kind: input, shape index: {}]
  %s1 = inlined_call_operand.hbm [shape: bf16[784,512], index: 1, kind: input, shape index: {}]
  %s2 = inlined_call_operand.hbm [shape: bf16[512,256], index: 2, kind: input, shape index: {}]
  %s3 = inlined_call_operand.hbm [shape: bf16[256,128], index: 3, kind: input, shape index: {}]
  %s4 = inlined_call_operand.hbm [shape: f32[6,512], index: 4, kind: input, shape index: {}]
  %s5 = inlined_call_operand.hbm [shape: f32[8,128], index: 5, kind: output, shape index: {}]
  %s6 = sld [smem:[#allocation0]]
  $region50: #{tpu_custom_call.1} parent=0
    _
  %s8 = ssub.s32 1, %s6
  %s9 = scalar_select 0, %s8, %s6
  $region1: #{tpu_custom_call.1} parent=0
    #allocation2 [shape = 'u8[14336]{0}', space=vmem, size = 0x3800, scoped, tag = 'input window, operand 0, single buffered']
    #allocation3 [shape = 's32[1]{0}', space=sflag, size = 0x4, scoped, tag = 'scoped memory for tpu_custom_call.1']
    #allocation4 [shape = 's32[1]{0}', space=sflag, size = 0x4, scoped, tag = 'scoped memory for tpu_custom_call.1']
    #allocation5 [shape = 'u8[802816]{0}', space=vmem, size = 0xc4000, scoped, tag = 'input window, operand 1, single buffered']
    #allocation6 [shape = 's32[1]{0}', space=sflag, size = 0x4, scoped, tag = 'scoped memory for tpu_custom_call.1']
    #allocation7 [shape = 'u8[262144]{0}', space=vmem, size = 0x40000, scoped, tag = 'input window, operand 2, single buffered']
    #allocation8 [shape = 'u8[65536]{0}', space=vmem, size = 0x10000, scoped, tag = 'input window, operand 3, single buffered']
    #allocation9 [shape = 's32[1]{0}', space=sflag, size = 0x4, scoped, tag = 'scoped memory for tpu_custom_call.1']
    #allocation10 [shape = 'u8[16384]{0}', space=vmem, size = 0x4000, scoped, tag = 'input window, operand 4, single buffered']
    #allocation11 [shape = 'u8[4096]{0}', space=vmem, size = 0x1000, scoped, tag = 'output window, operand 0, single buffered']
    %10 = vsyncpa [#allocation3], 0
    %11 = vsyncpa [#allocation6], 0
    %12 = vsyncpa [#allocation9], 0
    %13 = vsyncpa [#allocation4], 0
    // Predicated region
    $region2: #{tpu_custom_call.1} parent=1 // pred_check
      _
    $region3: #{tpu_custom_call.1} parent=1 // pred_check_branch
      %15 = sbr.rel (0) target = $region5
    $region4: #{tpu_custom_call.1} parent=1 // pred_region
      %17 = vsyncadd [#allocation3], 0
      %s19 = sshll.u32 %s0, 4
      %s20 = int_to_ptr.hbm [resolvable:$true] %s19
      %s21 = sshll.u32 [#allocation2], 4
      %s22 = int_to_ptr.vmem [resolvable:$true] %s21
      %24 = dma.hbm_to_vmem [thread:$0]  %s20, 448, %s22, [#allocation3]
    $region5: #{tpu_custom_call.1} parent=1 // pred_fallthru
      _
    // Predicated region
    $region6: #{tpu_custom_call.1} parent=1 // pred_check
      _
    $region7: #{tpu_custom_call.1} parent=1 // pred_check_branch
      %26 = sbr.rel (0) target = $region9
    $region8: #{tpu_custom_call.1} parent=1 // pred_region
      %28 = vsyncadd [#allocation6], 0
      %s29 = sshll.u32 %s1, 4
      %s30 = int_to_ptr.hbm [resolvable:$true] %s29
      %s31 = sshll.u32 [#allocation5], 4
      %s32 = int_to_ptr.vmem [resolvable:$true] %s31
      %37 = dma.hbm_to_vmem [thread:$0]  %s30, 25088, %s32, [#allocation6], 256, 256, 16
    $region9: #{tpu_custom_call.1} parent=1 // pred_fallthru
      _
    // Predicated region
    $region10: #{tpu_custom_call.1} parent=1 // pred_check
      _
    $region11: #{tpu_custom_call.1} parent=1 // pred_check_branch
      %39 = sbr.rel (0) target = $region13
    $region12: #{tpu_custom_call.1} parent=1 // pred_region
      %41 = vsyncadd [#allocation6], 0
      %s42 = sshll.u32 %s2, 4
      %s43 = int_to_ptr.hbm [resolvable:$true] %s42
      %s44 = sshll.u32 [#allocation7], 4
      %s45 = int_to_ptr.vmem [resolvable:$true] %s44
      %50 = dma.hbm_to_vmem [thread:$0]  %s43, 8192, %s45, [#allocation6], 128, 128, 8
    $region13: #{tpu_custom_call.1} parent=1 // pred_fallthru
      _
    // Predicated region
    $region14: #{tpu_custom_call.1} parent=1 // pred_check
      _
    $region15: #{tpu_custom_call.1} parent=1 // pred_check_branch
      %52 = sbr.rel (0) target = $region17
    $region16: #{tpu_custom_call.1} parent=1 // pred_region
      %54 = vsyncadd [#allocation9], 0
      %s55 = sshll.u32 %s3, 4
      %s56 = int_to_ptr.hbm [resolvable:$true] %s55
      %s57 = sshll.u32 [#allocation8], 4
      %s58 = int_to_ptr.vmem [resolvable:$true] %s57
      %63 = dma.hbm_to_vmem [thread:$0]  %s56, 2048, %s58, [#allocation9], 64, 64, 4
    $region17: #{tpu_custom_call.1} parent=1 // pred_fallthru
      _
    // Predicated region
    $region18: #{tpu_custom_call.1} parent=1 // pred_check
      _
    $region19: #{tpu_custom_call.1} parent=1 // pred_check_branch
      %65 = sbr.rel (0) target = $region21
    $region20: #{tpu_custom_call.1} parent=1 // pred_region
      %67 = vsyncadd [#allocation9], 0
      %s69 = sshll.u32 %s4, 4
      %s70 = int_to_ptr.hbm [resolvable:$true] %s69
      %s71 = sshll.u32 [#allocation10], 4
      %s72 = int_to_ptr.vmem [resolvable:$true] %s71
      %74 = dma.hbm_to_vmem [thread:$0]  %s70, 512, %s72, [#allocation9]
    $region21: #{tpu_custom_call.1} parent=1 // pred_fallthru
      _
    // Predicated region
    $region22: #{tpu_custom_call.1} parent=1 // pred_check
      _
    $region23: #{tpu_custom_call.1} parent=1 // pred_check_branch
      %76 = sbr.rel (0) target = $region25
    $region24: #{tpu_custom_call.1} parent=1 // pred_region
      %78 = dma.done [#allocation3], 448
    $region25: #{tpu_custom_call.1} parent=1 // pred_fallthru
      _
    // Predicated region
    $region26: #{tpu_custom_call.1} parent=1 // pred_check
      _
    $region27: #{tpu_custom_call.1} parent=1 // pred_check_branch
      %80 = sbr.rel (0) target = $region29
    $region28: #{tpu_custom_call.1} parent=1 // pred_region
      %82 = dma.done [#allocation6], 25088
    $region29: #{tpu_custom_call.1} parent=1 // pred_fallthru
      _
    // Predicated region
    $region30: #{tpu_custom_call.1} parent=1 // pred_check
      _
    $region31: #{tpu_custom_call.1} parent=1 // pred_check_branch
      %84 = sbr.rel (0) target = $region33
    $region32: #{tpu_custom_call.1} parent=1 // pred_region
      %86 = dma.done [#allocation6], 8192
    $region33: #{tpu_custom_call.1} parent=1 // pred_fallthru
      _
    // Predicated region
    $region34: #{tpu_custom_call.1} parent=1 // pred_check
      _
    $region35: #{tpu_custom_call.1} parent=1 // pred_check_branch
      %88 = sbr.rel (0) target = $region37
    $region36: #{tpu_custom_call.1} parent=1 // pred_region
      %90 = dma.done [#allocation9], 2048
    $region37: #{tpu_custom_call.1} parent=1 // pred_fallthru
      _
    // Predicated region
    $region38: #{tpu_custom_call.1} parent=1 // pred_check
      _
    $region39: #{tpu_custom_call.1} parent=1 // pred_check_branch
      %92 = sbr.rel (0) target = $region41
    $region40: #{tpu_custom_call.1} parent=1 // pred_region
      %94 = dma.done [#allocation9], 512
    $region41: #{tpu_custom_call.1} parent=1 // pred_fallthru
      _
    %v96 = vld [vmem:[#allocation2] sm:$0xff]
    %v97 = vld [vmem:[#allocation2 + $0x8] sm:$0xff]
    %v98 = vld [vmem:[#allocation2 + $0x10] sm:$0xff]
    %v99 = vld [vmem:[#allocation2 + $0x18] sm:$0xf]
    %v100 = vld [vmem:[#allocation10] sm:$0x3f]
    %v101 = vld [vmem:[#allocation10 + $0x8] sm:$0x3f]
    %v102 = vld [vmem:[#allocation10 + $0x10] sm:$0x3f]
    %v103 = vld [vmem:[#allocation10 + $0x18] sm:$0x3f]
    %v104 = vld [vmem:[#allocation5] sm:$0xff]
    %v105 = vld [vmem:[#allocation5 + $0x8] sm:$0xff]
    %v106 = vld [vmem:[#allocation5 + $0x10] sm:$0xff]
    %v107 = vld [vmem:[#allocation5 + $0x18] sm:$0xff]
    %v108 = vld [vmem:[#allocation5 + $0x20] sm:$0xff]
    %v109 = vld [vmem:[#allocation5 + $0x28] sm:$0xff]
    %v110 = vld [vmem:[#allocation5 + $0x30] sm:$0xff]
    %v111 = vld [vmem:[#allocation5 + $0x38] sm:$0xff]
    %v112 = vld [vmem:[#allocation5 + $0x40] sm:$0xff]
    %v113 = vld [vmem:[#allocation5 + $0x48] sm:$0xff]
    %v114 = vld [vmem:[#allocation5 + $0x50] sm:$0xff]
    %v115 = vld [vmem:[#allocation5 + $0x58] sm:$0xff]
    %v116 = vld [vmem:[#allocation5 + $0x60] sm:$0xff]
    %v117 = vld [vmem:[#allocation5 + $0x68] sm:$0xff]
    %v118 = vld [vmem:[#allocation5 + $0x70] sm:$0xff]
    %v119 = vld [vmem:[#allocation5 + $0x78] sm:$0xff]
    %v120 = vld [vmem:[#allocation5 + $0x80] sm:$0xff]
    %v121 = vld [vmem:[#allocation5 + $0x88] sm:$0xff]
    %v122 = vld [vmem:[#allocation5 + $0x90] sm:$0xff]
    %v123 = vld [vmem:[#allocation5 + $0x98] sm:$0xff]
    %v124 = vld [vmem:[#allocation5 + $0xa0] sm:$0xff]
    %v125 = vld [vmem:[#allocation5 + $0xa8] sm:$0xff]
    %v126 = vld [vmem:[#allocation5 + $0xb0] sm:$0xff]
    %v127 = vld [vmem:[#allocation5 + $0xb8] sm:$0xff]
    %v128 = vld [vmem:[#allocation5 + $0xc0] sm:$0xff]
    %v129 = vld [vmem:[#allocation5 + $0xc8] sm:$0xff]
    %v130 = vld [vmem:[#allocation5 + $0xd0] sm:$0xff]
    %v131 = vld [vmem:[#allocation5 + $0xd8] sm:$0xff]
    %v132 = vld [vmem:[#allocation5 + $0xe0] sm:$0xff]
    %v133 = vld [vmem:[#allocation5 + $0xe8] sm:$0xff]
    %v134 = vld [vmem:[#allocation5 + $0xf0] sm:$0xff]
    %v135 = vld [vmem:[#allocation5 + $0xf8] sm:$0xff]
    %v136 = vld [vmem:[#allocation5 + $0x100] sm:$0xff]
    %v137 = vld [vmem:[#allocation5 + $0x108] sm:$0xff]
    %v138 = vld [vmem:[#allocation5 + $0x110] sm:$0xff]
    %v139 = vld [vmem:[#allocation5 + $0x118] sm:$0xff]
    %v140 = vld [vmem:[#allocation5 + $0x120] sm:$0xff]
    %v141 = vld [vmem:[#allocation5 + $0x128] sm:$0xff]
    %v142 = vld [vmem:[#allocation5 + $0x130] sm:$0xff]
    %v143 = vld [vmem:[#allocation5 + $0x138] sm:$0xff]
    %v144 = vld [vmem:[#allocation5 + $0x140] sm:$0xff]
    %v145 = vld [vmem:[#allocation5 + $0x148] sm:$0xff]
    %v146 = vld [vmem:[#allocation5 + $0x150] sm:$0xff]
    %v147 = vld [vmem:[#allocation5 + $0x158] sm:$0xff]
    %v148 = vld [vmem:[#allocation5 + $0x160] sm:$0xff]
    %v149 = vld [vmem:[#allocation5 + $0x168] sm:$0xff]
    %v150 = vld [vmem:[#allocation5 + $0x170] sm:$0xff]
    %v151 = vld [vmem:[#allocation5 + $0x178] sm:$0xff]
    %v152 = vld [vmem:[#allocation5 + $0x180] sm:$0xff]
    %v153 = vld [vmem:[#allocation5 + $0x188] sm:$0xff]
    %v154 = vld [vmem:[#allocation5 + $0x190] sm:$0xff]
    %v155 = vld [vmem:[#allocation5 + $0x198] sm:$0xff]
    %v156 = vld [vmem:[#allocation5 + $0x1a0] sm:$0xff]
    %v157 = vld [vmem:[#allocation5 + $0x1a8] sm:$0xff]
    %v158 = vld [vmem:[#allocation5 + $0x1b0] sm:$0xff]
    %v159 = vld [vmem:[#allocation5 + $0x1b8] sm:$0xff]
    %v160 = vld [vmem:[#allocation5 + $0x1c0] sm:$0xff]
    %v161 = vld [vmem:[#allocation5 + $0x1c8] sm:$0xff]
    %v162 = vld [vmem:[#allocation5 + $0x1d0] sm:$0xff]
    %v163 = vld [vmem:[#allocation5 + $0x1d8] sm:$0xff]
    %v164 = vld [vmem:[#allocation5 + $0x1e0] sm:$0xff]
    %v165 = vld [vmem:[#allocation5 + $0x1e8] sm:$0xff]
    %v166 = vld [vmem:[#allocation5 + $0x1f0] sm:$0xff]
    %v167 = vld [vmem:[#allocation5 + $0x1f8] sm:$0xff]
    %v168 = vld [vmem:[#allocation5 + $0x200] sm:$0xff]
    %v169 = vld [vmem:[#allocation5 + $0x208] sm:$0xff]
    %v170 = vld [vmem:[#allocation5 + $0x210] sm:$0xff]
    %v171 = vld [vmem:[#allocation5 + $0x218] sm:$0xff]
    %v172 = vld [vmem:[#allocation5 + $0x220] sm:$0xff]
    %v173 = vld [vmem:[#allocation5 + $0x228] sm:$0xff]
    %v174 = vld [vmem:[#allocation5 + $0x230] sm:$0xff]
    %v175 = vld [vmem:[#allocation5 + $0x238] sm:$0xff]
    %v176 = vld [vmem:[#allocation5 + $0x240] sm:$0xff]
    %v177 = vld [vmem:[#allocation5 + $0x248] sm:$0xff]
    %v178 = vld [vmem:[#allocation5 + $0x250] sm:$0xff]
    %v179 = vld [vmem:[#allocation5 + $0x258] sm:$0xff]
    %v180 = vld [vmem:[#allocation5 + $0x260] sm:$0xff]
    %v181 = vld [vmem:[#allocation5 + $0x268] sm:$0xff]
    %v182 = vld [vmem:[#allocation5 + $0x270] sm:$0xff]
    %v183 = vld [vmem:[#allocation5 + $0x278] sm:$0xff]
    %v184 = vld [vmem:[#allocation5 + $0x280] sm:$0xff]
    %v185 = vld [vmem:[#allocation5 + $0x288] sm:$0xff]
    %v186 = vld [vmem:[#allocation5 + $0x290] sm:$0xff]
    %v187 = vld [vmem:[#allocation5 + $0x298] sm:$0xff]
    %v188 = vld [vmem:[#allocation5 + $0x2a0] sm:$0xff]
    %v189 = vld [vmem:[#allocation5 + $0x2a8] sm:$0xff]
    %v190 = vld [vmem:[#allocation5 + $0x2b0] sm:$0xff]
    %v191 = vld [vmem:[#allocation5 + $0x2b8] sm:$0xff]
    %v192 = vld [vmem:[#allocation5 + $0x2c0] sm:$0xff]
    %v193 = vld [vmem:[#allocation5 + $0x2c8] sm:$0xff]
    %v194 = vld [vmem:[#allocation5 + $0x2d0] sm:$0xff]
    %v195 = vld [vmem:[#allocation5 + $0x2d8] sm:$0xff]
    %v196 = vld [vmem:[#allocation5 + $0x2e0] sm:$0xff]
    %v197 = vld [vmem:[#allocation5 + $0x2e8] sm:$0xff]
    %v198 = vld [vmem:[#allocation5 + $0x2f0] sm:$0xff]
    %v199 = vld [vmem:[#allocation5 + $0x2f8] sm:$0xff]
    %v200 = vld [vmem:[#allocation5 + $0x300] sm:$0xff]
    %v201 = vld [vmem:[#allocation5 + $0x308] sm:$0xff]
    %v202 = vld [vmem:[#allocation5 + $0x310] sm:$0xff]
    %v203 = vld [vmem:[#allocation5 + $0x318] sm:$0xff]
    %v204 = vld [vmem:[#allocation5 + $0x320] sm:$0xff]
    %v205 = vld [vmem:[#allocation5 + $0x328] sm:$0xff]
    %v206 = vld [vmem:[#allocation5 + $0x330] sm:$0xff]
    %v207 = vld [vmem:[#allocation5 + $0x338] sm:$0xff]
    %v208 = vld [vmem:[#allocation5 + $0x340] sm:$0xff]
    %v209 = vld [vmem:[#allocation5 + $0x348] sm:$0xff]
    %v210 = vld [vmem:[#allocation5 + $0x350] sm:$0xff]
    %v211 = vld [vmem:[#allocation5 + $0x358] sm:$0xff]
    %v212 = vld [vmem:[#allocation5 + $0x360] sm:$0xff]
    %v213 = vld [vmem:[#allocation5 + $0x368] sm:$0xff]
    %v214 = vld [vmem:[#allocation5 + $0x370] sm:$0xff]
    %v215 = vld [vmem:[#allocation5 + $0x378] sm:$0xff]
    %v216 = vld [vmem:[#allocation5 + $0x380] sm:$0xff]
    %v217 = vld [vmem:[#allocation5 + $0x388] sm:$0xff]
    %v218 = vld [vmem:[#allocation5 + $0x390] sm:$0xff]
    %v219 = vld [vmem:[#allocation5 + $0x398] sm:$0xff]
    %v220 = vld [vmem:[#allocation5 + $0x3a0] sm:$0xff]
    %v221 = vld [vmem:[#allocation5 + $0x3a8] sm:$0xff]
    %v222 = vld [vmem:[#allocation5 + $0x3b0] sm:$0xff]
    %v223 = vld [vmem:[#allocation5 + $0x3b8] sm:$0xff]
    %v224 = vld [vmem:[#allocation5 + $0x3c0] sm:$0xff]
    %v225 = vld [vmem:[#allocation5 + $0x3c8] sm:$0xff]
    %v226 = vld [vmem:[#allocation5 + $0x3d0] sm:$0xff]
    %v227 = vld [vmem:[#allocation5 + $0x3d8] sm:$0xff]
    %v228 = vld [vmem:[#allocation5 + $0x3e0] sm:$0xff]
    %v229 = vld [vmem:[#allocation5 + $0x3e8] sm:$0xff]
    %v230 = vld [vmem:[#allocation5 + $0x3f0] sm:$0xff]
    %v231 = vld [vmem:[#allocation5 + $0x3f8] sm:$0xff]
    %v232 = vld [vmem:[#allocation5 + $0x400] sm:$0xff]
    %v233 = vld [vmem:[#allocation5 + $0x408] sm:$0xff]
    %v234 = vld [vmem:[#allocation5 + $0x410] sm:$0xff]
    %v235 = vld [vmem:[#allocation5 + $0x418] sm:$0xff]
    %v236 = vld [vmem:[#allocation5 + $0x420] sm:$0xff]
    %v237 = vld [vmem:[#allocation5 + $0x428] sm:$0xff]
    %v238 = vld [vmem:[#allocation5 + $0x430] sm:$0xff]
    %v239 = vld [vmem:[#allocation5 + $0x438] sm:$0xff]
    %v240 = vld [vmem:[#allocation5 + $0x440] sm:$0xff]
    %v241 = vld [vmem:[#allocation5 + $0x448] sm:$0xff]
    %v242 = vld [vmem:[#allocation5 + $0x450] sm:$0xff]
    %v243 = vld [vmem:[#allocation5 + $0x458] sm:$0xff]
    %v244 = vld [vmem:[#allocation5 + $0x460] sm:$0xff]
    %v245 = vld [vmem:[#allocation5 + $0x468] sm:$0xff]
    %v246 = vld [vmem:[#allocation5 + $0x470] sm:$0xff]
    %v247 = vld [vmem:[#allocation5 + $0x478] sm:$0xff]
    %v248 = vld [vmem:[#allocation5 + $0x480] sm:$0xff]
    %v249 = vld [vmem:[#allocation5 + $0x488] sm:$0xff]
    %v250 = vld [vmem:[#allocation5 + $0x490] sm:$0xff]
    %v251 = vld [vmem:[#allocation5 + $0x498] sm:$0xff]
    %v252 = vld [vmem:[#allocation5 + $0x4a0] sm:$0xff]
    %v253 = vld [vmem:[#allocation5 + $0x4a8] sm:$0xff]
    %v254 = vld [vmem:[#allocation5 + $0x4b0] sm:$0xff]
    %v255 = vld [vmem:[#allocation5 + $0x4b8] sm:$0xff]
    %v256 = vld [vmem:[#allocation5 + $0x4c0] sm:$0xff]
    %v257 = vld [vmem:[#allocation5 + $0x4c8] sm:$0xff]
    %v258 = vld [vmem:[#allocation5 + $0x4d0] sm:$0xff]
    %v259 = vld [vmem:[#allocation5 + $0x4d8] sm:$0xff]
    %v260 = vld [vmem:[#allocation5 + $0x4e0] sm:$0xff]
    %v261 = vld [vmem:[#allocation5 + $0x4e8] sm:$0xff]
    %v262 = vld [vmem:[#allocation5 + $0x4f0] sm:$0xff]
    %v263 = vld [vmem:[#allocation5 + $0x4f8] sm:$0xff]
    %v264 = vld [vmem:[#allocation5 + $0x500] sm:$0xff]
    %v265 = vld [vmem:[#allocation5 + $0x508] sm:$0xff]
    %v266 = vld [vmem:[#allocation5 + $0x510] sm:$0xff]
    %v267 = vld [vmem:[#allocation5 + $0x518] sm:$0xff]
    %v268 = vld [vmem:[#allocation5 + $0x520] sm:$0xff]
    %v269 = vld [vmem:[#allocation5 + $0x528] sm:$0xff]
    %v270 = vld [vmem:[#allocation5 + $0x530] sm:$0xff]
    %v271 = vld [vmem:[#allocation5 + $0x538] sm:$0xff]
    %v272 = vld [vmem:[#allocation5 + $0x540] sm:$0xff]
    %v273 = vld [vmem:[#allocation5 + $0x548] sm:$0xff]
    %v274 = vld [vmem:[#allocation5 + $0x550] sm:$0xff]
    %v275 = vld [vmem:[#allocation5 + $0x558] sm:$0xff]
    %v276 = vld [vmem:[#allocation5 + $0x560] sm:$0xff]
    %v277 = vld [vmem:[#allocation5 + $0x568] sm:$0xff]
    %v278 = vld [vmem:[#allocation5 + $0x570] sm:$0xff]
    %v279 = vld [vmem:[#allocation5 + $0x578] sm:$0xff]
    %v280 = vld [vmem:[#allocation5 + $0x580] sm:$0xff]
    %v281 = vld [vmem:[#allocation5 + $0x588] sm:$0xff]
    %v282 = vld [vmem:[#allocation5 + $0x590] sm:$0xff]
    %v283 = vld [vmem:[#allocation5 + $0x598] sm:$0xff]
    %v284 = vld [vmem:[#allocation5 + $0x5a0] sm:$0xff]
    %v285 = vld [vmem:[#allocation5 + $0x5a8] sm:$0xff]
    %v286 = vld [vmem:[#allocation5 + $0x5b0] sm:$0xff]
    %v287 = vld [vmem:[#allocation5 + $0x5b8] sm:$0xff]
    %v288 = vld [vmem:[#allocation5 + $0x5c0] sm:$0xff]
    %v289 = vld [vmem:[#allocation5 + $0x5c8] sm:$0xff]
    %v290 = vld [vmem:[#allocation5 + $0x5d0] sm:$0xff]
    %v291 = vld [vmem:[#allocation5 + $0x5d8] sm:$0xff]
    %v292 = vld [vmem:[#allocation5 + $0x5e0] sm:$0xff]
    %v293 = vld [vmem:[#allocation5 + $0x5e8] sm:$0xff]
    %v294 = vld [vmem:[#allocation5 + $0x5f0] sm:$0xff]
    %v295 = vld [vmem:[#allocation5 + $0x5f8] sm:$0xff]
    %v296 = vld [vmem:[#allocation5 + $0x600] sm:$0xff]
    %v297 = vld [vmem:[#allocation5 + $0x608] sm:$0xff]
    %v298 = vld [vmem:[#allocation5 + $0x610] sm:$0xff]
    %v299 = vld [vmem:[#allocation5 + $0x618] sm:$0xff]
    %v304 = vunpack.c.l.b16 %v96
    %v305 = vunpack.c.h.b16 %v96
    %v306 = vunpack.c.l.b16 %v97
    %v307 = vunpack.c.h.b16 %v97
    %v308 = vunpack.c.l.b16 %v98
    %v309 = vunpack.c.h.b16 %v98
    %v310 = vunpack.c.l.b16 %v99
    %v311 = vpack.c.b16 %v304, %v304
    %v312 = vpack.c.b16 %v305, %v305
    %v313 = vpack.c.b16 %v306, %v306
    %v314 = vpack.c.b16 %v307, %v307
    %v315 = vpack.c.b16 %v308, %v308
    %v316 = vpack.c.b16 %v309, %v309
    %v317 = vpack.c.b16 %v310, %v310
    %v520 = vunpack.c.l.b16 %v104
    %v521 = vunpack.c.h.b16 %v104
    %v522 = vunpack.c.l.b16 %v105
    %v523 = vunpack.c.h.b16 %v105
    %v524 = vunpack.c.l.b16 %v106
    %v525 = vunpack.c.h.b16 %v106
    %v526 = vunpack.c.l.b16 %v107
    %v527 = vunpack.c.h.b16 %v107
    %v528 = vunpack.c.l.b16 %v108
    %v529 = vunpack.c.h.b16 %v108
    %v530 = vunpack.c.l.b16 %v109
    %v531 = vunpack.c.h.b16 %v109
    %v532 = vunpack.c.l.b16 %v110
    %v533 = vunpack.c.h.b16 %v110
    %v534 = vunpack.c.l.b16 %v111
    %v535 = vunpack.c.h.b16 %v111
    %v536 = vunpack.c.l.b16 %v112
    %v537 = vunpack.c.h.b16 %v112
    %v538 = vunpack.c.l.b16 %v113
    %v539 = vunpack.c.h.b16 %v113
    %v540 = vunpack.c.l.b16 %v114
    %v541 = vunpack.c.h.b16 %v114
    %v542 = vunpack.c.l.b16 %v115
    %v543 = vunpack.c.h.b16 %v115
    %v544 = vunpack.c.l.b16 %v116
    %v545 = vunpack.c.h.b16 %v116
    %v546 = vunpack.c.l.b16 %v117
    %v547 = vunpack.c.h.b16 %v117
    %v548 = vunpack.c.l.b16 %v118
    %v549 = vunpack.c.h.b16 %v118
    %v550 = vunpack.c.l.b16 %v119
    %v551 = vunpack.c.h.b16 %v119
    %v552 = vunpack.c.l.b16 %v120
    %v553 = vunpack.c.h.b16 %v120
    %v554 = vunpack.c.l.b16 %v121
    %v555 = vunpack.c.h.b16 %v121
    %v556 = vunpack.c.l.b16 %v122
    %v557 = vunpack.c.h.b16 %v122
    %v558 = vunpack.c.l.b16 %v123
    %v559 = vunpack.c.h.b16 %v123
    %v560 = vunpack.c.l.b16 %v124
    %v561 = vunpack.c.h.b16 %v124
    %v562 = vunpack.c.l.b16 %v125
    %v563 = vunpack.c.h.b16 %v125
    %v564 = vunpack.c.l.b16 %v126
    %v565 = vunpack.c.h.b16 %v126
    %v566 = vunpack.c.l.b16 %v127
    %v567 = vunpack.c.h.b16 %v127
    %v568 = vunpack.c.l.b16 %v128
    %v569 = vunpack.c.h.b16 %v128
    %v570 = vunpack.c.l.b16 %v129
    %v571 = vunpack.c.h.b16 %v129
    %v572 = vunpack.c.l.b16 %v130
    %v573 = vunpack.c.h.b16 %v130
    %v574 = vunpack.c.l.b16 %v131
    %v575 = vunpack.c.h.b16 %v131
    %v576 = vunpack.c.l.b16 %v132
    %v577 = vunpack.c.h.b16 %v132
    %v578 = vunpack.c.l.b16 %v133
    %v579 = vunpack.c.h.b16 %v133
    %v580 = vunpack.c.l.b16 %v134
    %v581 = vunpack.c.h.b16 %v134
    %v582 = vunpack.c.l.b16 %v135
    %v583 = vunpack.c.h.b16 %v135
    %v584 = vunpack.c.l.b16 %v136
    %v585 = vunpack.c.h.b16 %v136
    %v586 = vunpack.c.l.b16 %v137
    %v587 = vunpack.c.h.b16 %v137
    %v588 = vunpack.c.l.b16 %v138
    %v589 = vunpack.c.h.b16 %v138
    %v590 = vunpack.c.l.b16 %v139
    %v591 = vunpack.c.h.b16 %v139
    %v592 = vunpack.c.l.b16 %v140
    %v593 = vunpack.c.h.b16 %v140
    %v594 = vunpack.c.l.b16 %v141
    %v595 = vunpack.c.h.b16 %v141
    %v596 = vunpack.c.l.b16 %v142
    %v597 = vunpack.c.h.b16 %v142
    %v598 = vunpack.c.l.b16 %v143
    %v599 = vunpack.c.h.b16 %v143
    %v600 = vunpack.c.l.b16 %v144
    %v601 = vunpack.c.h.b16 %v144
    %v602 = vunpack.c.l.b16 %v145
    %v603 = vunpack.c.h.b16 %v145
    %v604 = vunpack.c.l.b16 %v146
    %v605 = vunpack.c.h.b16 %v146
    %v606 = vunpack.c.l.b16 %v147
    %v607 = vunpack.c.h.b16 %v147
    %v608 = vunpack.c.l.b16 %v148
    %v609 = vunpack.c.h.b16 %v148
    %v610 = vunpack.c.l.b16 %v149
    %v611 = vunpack.c.h.b16 %v149
    %v612 = vunpack.c.l.b16 %v150
    %v613 = vunpack.c.h.b16 %v150
    %v614 = vunpack.c.l.b16 %v151
    %v615 = vunpack.c.h.b16 %v151
    %v616 = vunpack.c.l.b16 %v152
    %v617 = vunpack.c.h.b16 %v152
    %v618 = vunpack.c.l.b16 %v153
    %v619 = vunpack.c.h.b16 %v153
    %v620 = vunpack.c.l.b16 %v154
    %v621 = vunpack.c.h.b16 %v154
    %v622 = vunpack.c.l.b16 %v155
    %v623 = vunpack.c.h.b16 %v155
    %v624 = vunpack.c.l.b16 %v156
    %v625 = vunpack.c.h.b16 %v156
    %v626 = vunpack.c.l.b16 %v157
    %v627 = vunpack.c.h.b16 %v157
    %v628 = vunpack.c.l.b16 %v158
    %v629 = vunpack.c.h.b16 %v158
    %v630 = vunpack.c.l.b16 %v159
    %v631 = vunpack.c.h.b16 %v159
    %v632 = vunpack.c.l.b16 %v160
    %v633 = vunpack.c.h.b16 %v160
    %v634 = vunpack.c.l.b16 %v161
    %v635 = vunpack.c.h.b16 %v161
    %v636 = vunpack.c.l.b16 %v162
    %v637 = vunpack.c.h.b16 %v162
    %v638 = vunpack.c.l.b16 %v163
    %v639 = vunpack.c.h.b16 %v163
    %v640 = vunpack.c.l.b16 %v164
    %v641 = vunpack.c.h.b16 %v164
    %v642 = vunpack.c.l.b16 %v165
    %v643 = vunpack.c.h.b16 %v165
    %v644 = vunpack.c.l.b16 %v166
    %v645 = vunpack.c.h.b16 %v166
    %v646 = vunpack.c.l.b16 %v167
    %v647 = vunpack.c.h.b16 %v167
    %v648 = vunpack.c.l.b16 %v168
    %v649 = vunpack.c.h.b16 %v168
    %v650 = vunpack.c.l.b16 %v169
    %v651 = vunpack.c.h.b16 %v169
    %v652 = vunpack.c.l.b16 %v170
    %v653 = vunpack.c.h.b16 %v170
    %v654 = vunpack.c.l.b16 %v171
    %v655 = vunpack.c.h.b16 %v171
    %v656 = vunpack.c.l.b16 %v172
    %v657 = vunpack.c.h.b16 %v172
    %v658 = vunpack.c.l.b16 %v173
    %v659 = vunpack.c.h.b16 %v173
    %v660 = vunpack.c.l.b16 %v174
    %v661 = vunpack.c.h.b16 %v174
    %v662 = vunpack.c.l.b16 %v175
    %v663 = vunpack.c.h.b16 %v175
    %v664 = vunpack.c.l.b16 %v176
    %v665 = vunpack.c.h.b16 %v176
    %v666 = vunpack.c.l.b16 %v177
    %v667 = vunpack.c.h.b16 %v177
    %v668 = vunpack.c.l.b16 %v178
    %v669 = vunpack.c.h.b16 %v178
    %v670 = vunpack.c.l.b16 %v179
    %v671 = vunpack.c.h.b16 %v179
    %v672 = vunpack.c.l.b16 %v180
    %v673 = vunpack.c.h.b16 %v180
    %v674 = vunpack.c.l.b16 %v181
    %v675 = vunpack.c.h.b16 %v181
    %v676 = vunpack.c.l.b16 %v182
    %v677 = vunpack.c.h.b16 %v182
    %v678 = vunpack.c.l.b16 %v183
    %v679 = vunpack.c.h.b16 %v183
    %v680 = vunpack.c.l.b16 %v184
    %v681 = vunpack.c.h.b16 %v184
    %v682 = vunpack.c.l.b16 %v185
    %v683 = vunpack.c.h.b16 %v185
    %v684 = vunpack.c.l.b16 %v186
    %v685 = vunpack.c.h.b16 %v186
    %v686 = vunpack.c.l.b16 %v187
    %v687 = vunpack.c.h.b16 %v187
    %v688 = vunpack.c.l.b16 %v188
    %v689 = vunpack.c.h.b16 %v188
    %v690 = vunpack.c.l.b16 %v189
    %v691 = vunpack.c.h.b16 %v189
    %v692 = vunpack.c.l.b16 %v190
    %v693 = vunpack.c.h.b16 %v190
    %v694 = vunpack.c.l.b16 %v191
    %v695 = vunpack.c.h.b16 %v191
    %v696 = vunpack.c.l.b16 %v192
    %v697 = vunpack.c.h.b16 %v192
    %v698 = vunpack.c.l.b16 %v193
    %v699 = vunpack.c.h.b16 %v193
    %v700 = vunpack.c.l.b16 %v194
    %v701 = vunpack.c.h.b16 %v194
    %v702 = vunpack.c.l.b16 %v195
    %v703 = vunpack.c.h.b16 %v195
    %v704 = vunpack.c.l.b16 %v196
    %v705 = vunpack.c.h.b16 %v196
    %v706 = vunpack.c.l.b16 %v197
    %v707 = vunpack.c.h.b16 %v197
    %v708 = vunpack.c.l.b16 %v198
    %v709 = vunpack.c.h.b16 %v198
    %v710 = vunpack.c.l.b16 %v199
    %v711 = vunpack.c.h.b16 %v199
    %v712 = vunpack.c.l.b16 %v200
    %v713 = vunpack.c.h.b16 %v200
    %v714 = vunpack.c.l.b16 %v201
    %v715 = vunpack.c.h.b16 %v201
    %v716 = vunpack.c.l.b16 %v202
    %v717 = vunpack.c.h.b16 %v202
    %v718 = vunpack.c.l.b16 %v203
    %v719 = vunpack.c.h.b16 %v203
    %v720 = vunpack.c.l.b16 %v204
    %v721 = vunpack.c.h.b16 %v204
    %v722 = vunpack.c.l.b16 %v205
    %v723 = vunpack.c.h.b16 %v205
    %v724 = vunpack.c.l.b16 %v206
    %v725 = vunpack.c.h.b16 %v206
    %v726 = vunpack.c.l.b16 %v207
    %v727 = vunpack.c.h.b16 %v207
    %v728 = vunpack.c.l.b16 %v208
    %v729 = vunpack.c.h.b16 %v208
    %v730 = vunpack.c.l.b16 %v209
    %v731 = vunpack.c.h.b16 %v209
    %v732 = vunpack.c.l.b16 %v210
    %v733 = vunpack.c.h.b16 %v210
    %v734 = vunpack.c.l.b16 %v211
    %v735 = vunpack.c.h.b16 %v211
    %v736 = vunpack.c.l.b16 %v212
    %v737 = vunpack.c.h.b16 %v212
    %v738 = vunpack.c.l.b16 %v213
    %v739 = vunpack.c.h.b16 %v213
    %v740 = vunpack.c.l.b16 %v214
    %v741 = vunpack.c.h.b16 %v214
    %v742 = vunpack.c.l.b16 %v215
    %v743 = vunpack.c.h.b16 %v215
    %v744 = vunpack.c.l.b16 %v216
    %v745 = vunpack.c.h.b16 %v216
    %v746 = vunpack.c.l.b16 %v217
    %v747 = vunpack.c.h.b16 %v217
    %v748 = vunpack.c.l.b16 %v218
    %v749 = vunpack.c.h.b16 %v218
    %v750 = vunpack.c.l.b16 %v219
    %v751 = vunpack.c.h.b16 %v219
    %v752 = vunpack.c.l.b16 %v220
    %v753 = vunpack.c.h.b16 %v220
    %v754 = vunpack.c.l.b16 %v221
    %v755 = vunpack.c.h.b16 %v221
    %v756 = vunpack.c.l.b16 %v222
    %v757 = vunpack.c.h.b16 %v222
    %v758 = vunpack.c.l.b16 %v223
    %v759 = vunpack.c.h.b16 %v223
    %v760 = vunpack.c.l.b16 %v224
    %v761 = vunpack.c.h.b16 %v224
    %v762 = vunpack.c.l.b16 %v225
    %v763 = vunpack.c.h.b16 %v225
    %v764 = vunpack.c.l.b16 %v226
    %v765 = vunpack.c.h.b16 %v226
    %v766 = vunpack.c.l.b16 %v227
    %v767 = vunpack.c.h.b16 %v227
    %v768 = vunpack.c.l.b16 %v228
    %v769 = vunpack.c.h.b16 %v228
    %v770 = vunpack.c.l.b16 %v229
    %v771 = vunpack.c.h.b16 %v229
    %v772 = vunpack.c.l.b16 %v230
    %v773 = vunpack.c.h.b16 %v230
    %v774 = vunpack.c.l.b16 %v231
    %v775 = vunpack.c.h.b16 %v231
    %v776 = vunpack.c.l.b16 %v232
    %v777 = vunpack.c.h.b16 %v232
    %v778 = vunpack.c.l.b16 %v233
    %v779 = vunpack.c.h.b16 %v233
    %v780 = vunpack.c.l.b16 %v234
    %v781 = vunpack.c.h.b16 %v234
    %v782 = vunpack.c.l.b16 %v235
    %v783 = vunpack.c.h.b16 %v235
    %v784 = vunpack.c.l.b16 %v236
    %v785 = vunpack.c.h.b16 %v236
    %v786 = vunpack.c.l.b16 %v237
    %v787 = vunpack.c.h.b16 %v237
    %v788 = vunpack.c.l.b16 %v238
    %v789 = vunpack.c.h.b16 %v238
    %v790 = vunpack.c.l.b16 %v239
    %v791 = vunpack.c.h.b16 %v239
    %v792 = vunpack.c.l.b16 %v240
    %v793 = vunpack.c.h.b16 %v240
    %v794 = vunpack.c.l.b16 %v241
    %v795 = vunpack.c.h.b16 %v241
    %v796 = vunpack.c.l.b16 %v242
    %v797 = vunpack.c.h.b16 %v242
    %v798 = vunpack.c.l.b16 %v243
    %v799 = vunpack.c.h.b16 %v243
    %v800 = vunpack.c.l.b16 %v244
    %v801 = vunpack.c.h.b16 %v244
    %v802 = vunpack.c.l.b16 %v245
    %v803 = vunpack.c.h.b16 %v245
    %v804 = vunpack.c.l.b16 %v246
    %v805 = vunpack.c.h.b16 %v246
    %v806 = vunpack.c.l.b16 %v247
    %v807 = vunpack.c.h.b16 %v247
    %v808 = vunpack.c.l.b16 %v248
    %v809 = vunpack.c.h.b16 %v248
    %v810 = vunpack.c.l.b16 %v249
    %v811 = vunpack.c.h.b16 %v249
    %v812 = vunpack.c.l.b16 %v250
    %v813 = vunpack.c.h.b16 %v250
    %v814 = vunpack.c.l.b16 %v251
    %v815 = vunpack.c.h.b16 %v251
    %v816 = vunpack.c.l.b16 %v252
    %v817 = vunpack.c.h.b16 %v252
    %v818 = vunpack.c.l.b16 %v253
    %v819 = vunpack.c.h.b16 %v253
    %v820 = vunpack.c.l.b16 %v254
    %v821 = vunpack.c.h.b16 %v254
    %v822 = vunpack.c.l.b16 %v255
    %v823 = vunpack.c.h.b16 %v255
    %v824 = vunpack.c.l.b16 %v256
    %v825 = vunpack.c.h.b16 %v256
    %v826 = vunpack.c.l.b16 %v257
    %v827 = vunpack.c.h.b16 %v257
    %v828 = vunpack.c.l.b16 %v258
    %v829 = vunpack.c.h.b16 %v258
    %v830 = vunpack.c.l.b16 %v259
    %v831 = vunpack.c.h.b16 %v259
    %v832 = vunpack.c.l.b16 %v260
    %v833 = vunpack.c.h.b16 %v260
    %v834 = vunpack.c.l.b16 %v261
    %v835 = vunpack.c.h.b16 %v261
    %v836 = vunpack.c.l.b16 %v262
    %v837 = vunpack.c.h.b16 %v262
    %v838 = vunpack.c.l.b16 %v263
    %v839 = vunpack.c.h.b16 %v263
    %v840 = vunpack.c.l.b16 %v264
    %v841 = vunpack.c.h.b16 %v264
    %v842 = vunpack.c.l.b16 %v265
    %v843 = vunpack.c.h.b16 %v265
    %v844 = vunpack.c.l.b16 %v266
    %v845 = vunpack.c.h.b16 %v266
    %v846 = vunpack.c.l.b16 %v267
    %v847 = vunpack.c.h.b16 %v267
    %v848 = vunpack.c.l.b16 %v268
    %v849 = vunpack.c.h.b16 %v268
    %v850 = vunpack.c.l.b16 %v269
    %v851 = vunpack.c.h.b16 %v269
    %v852 = vunpack.c.l.b16 %v270
    %v853 = vunpack.c.h.b16 %v270
    %v854 = vunpack.c.l.b16 %v271
    %v855 = vunpack.c.h.b16 %v271
    %v856 = vunpack.c.l.b16 %v272
    %v857 = vunpack.c.h.b16 %v272
    %v858 = vunpack.c.l.b16 %v273
    %v859 = vunpack.c.h.b16 %v273
    %v860 = vunpack.c.l.b16 %v274
    %v861 = vunpack.c.h.b16 %v274
    %v862 = vunpack.c.l.b16 %v275
    %v863 = vunpack.c.h.b16 %v275
    %v864 = vunpack.c.l.b16 %v276
    %v865 = vunpack.c.h.b16 %v276
    %v866 = vunpack.c.l.b16 %v277
    %v867 = vunpack.c.h.b16 %v277
    %v868 = vunpack.c.l.b16 %v278
    %v869 = vunpack.c.h.b16 %v278
    %v870 = vunpack.c.l.b16 %v279
    %v871 = vunpack.c.h.b16 %v279
    %v872 = vunpack.c.l.b16 %v280
    %v873 = vunpack.c.h.b16 %v280
    %v874 = vunpack.c.l.b16 %v281
    %v875 = vunpack.c.h.b16 %v281
    %v876 = vunpack.c.l.b16 %v282
    %v877 = vunpack.c.h.b16 %v282
    %v878 = vunpack.c.l.b16 %v283
    %v879 = vunpack.c.h.b16 %v283
    %v880 = vunpack.c.l.b16 %v284
    %v881 = vunpack.c.h.b16 %v284
    %v882 = vunpack.c.l.b16 %v285
    %v883 = vunpack.c.h.b16 %v285
    %v884 = vunpack.c.l.b16 %v286
    %v885 = vunpack.c.h.b16 %v286
    %v886 = vunpack.c.l.b16 %v287
    %v887 = vunpack.c.h.b16 %v287
    %v888 = vunpack.c.l.b16 %v288
    %v889 = vunpack.c.h.b16 %v288
    %v890 = vunpack.c.l.b16 %v289
    %v891 = vunpack.c.h.b16 %v289
    %v892 = vunpack.c.l.b16 %v290
    %v893 = vunpack.c.h.b16 %v290
    %v894 = vunpack.c.l.b16 %v291
    %v895 = vunpack.c.h.b16 %v291
    %v896 = vunpack.c.l.b16 %v292
    %v897 = vunpack.c.h.b16 %v292
    %v898 = vunpack.c.l.b16 %v293
    %v899 = vunpack.c.h.b16 %v293
    %v900 = vunpack.c.l.b16 %v294
    %v901 = vunpack.c.h.b16 %v294
    %v902 = vunpack.c.l.b16 %v295
    %v903 = vunpack.c.h.b16 %v295
    %v904 = vunpack.c.l.b16 %v296
    %v905 = vunpack.c.h.b16 %v296
    %v906 = vunpack.c.l.b16 %v297
    %v907 = vunpack.c.h.b16 %v297
    %v908 = vunpack.c.l.b16 %v298
    %v909 = vunpack.c.h.b16 %v298
    %v910 = vunpack.c.l.b16 %v299
    %v911 = vunpack.c.h.b16 %v299
    %v912 = vpack.c.b16 %v524, %v520
    %v913 = vpack.c.b16 %v525, %v521
    %v914 = vpack.c.b16 %v526, %v522
    %v915 = vpack.c.b16 %v527, %v523
    %v916 = vpack.c.b16 %v532, %v528
    %v917 = vpack.c.b16 %v533, %v529
    %v918 = vpack.c.b16 %v534, %v530
    %v919 = vpack.c.b16 %v535, %v531
    %v920 = vpack.c.b16 %v540, %v536
    %v921 = vpack.c.b16 %v541, %v537
    %v922 = vpack.c.b16 %v542, %v538
    %v923 = vpack.c.b16 %v543, %v539
    %v924 = vpack.c.b16 %v548, %v544
    %v925 = vpack.c.b16 %v549, %v545
    %v926 = vpack.c.b16 %v550, %v546
    %v927 = vpack.c.b16 %v551, %v547
    %v928 = vpack.c.b16 %v556, %v552
    %v929 = vpack.c.b16 %v557, %v553
    %v930 = vpack.c.b16 %v558, %v554
    %v931 = vpack.c.b16 %v559, %v555
    %v932 = vpack.c.b16 %v564, %v560
    %v933 = vpack.c.b16 %v565, %v561
    %v934 = vpack.c.b16 %v566, %v562
    %v935 = vpack.c.b16 %v567, %v563
    %v936 = vpack.c.b16 %v572, %v568
    %v937 = vpack.c.b16 %v573, %v569
    %v938 = vpack.c.b16 %v574, %v570
    %v939 = vpack.c.b16 %v575, %v571
    %v940 = vpack.c.b16 %v580, %v576
    %v941 = vpack.c.b16 %v581, %v577
    %v942 = vpack.c.b16 %v582, %v578
    %v943 = vpack.c.b16 %v583, %v579
    %v944 = vpack.c.b16 %v588, %v584
    %v945 = vpack.c.b16 %v589, %v585
    %v946 = vpack.c.b16 %v590, %v586
    %v947 = vpack.c.b16 %v591, %v587
    %v948 = vpack.c.b16 %v596, %v592
    %v949 = vpack.c.b16 %v597, %v593
    %v950 = vpack.c.b16 %v598, %v594
    %v951 = vpack.c.b16 %v599, %v595
    %v952 = vpack.c.b16 %v604, %v600
    %v953 = vpack.c.b16 %v605, %v601
    %v954 = vpack.c.b16 %v606, %v602
    %v955 = vpack.c.b16 %v607, %v603
    %v956 = vpack.c.b16 %v612, %v608
    %v957 = vpack.c.b16 %v613, %v609
    %v958 = vpack.c.b16 %v614, %v610
    %v959 = vpack.c.b16 %v615, %v611
    %v960 = vpack.c.b16 %v620, %v616
    %v961 = vpack.c.b16 %v621, %v617
    %v962 = vpack.c.b16 %v622, %v618
    %v963 = vpack.c.b16 %v623, %v619
    %v964 = vpack.c.b16 %v628, %v624
    %v965 = vpack.c.b16 %v629, %v625
    %v966 = vpack.c.b16 %v630, %v626
    %v967 = vpack.c.b16 %v631, %v627
    %v968 = vpack.c.b16 %v636, %v632
    %v969 = vpack.c.b16 %v637, %v633
    %v970 = vpack.c.b16 %v638, %v634
    %v971 = vpack.c.b16 %v639, %v635
    %v972 = vpack.c.b16 %v644, %v640
    %v973 = vpack.c.b16 %v645, %v641
    %v974 = vpack.c.b16 %v646, %v642
    %v975 = vpack.c.b16 %v647, %v643
    %v976 = vpack.c.b16 %v652, %v648
    %v977 = vpack.c.b16 %v653, %v649
    %v978 = vpack.c.b16 %v654, %v650
    %v979 = vpack.c.b16 %v655, %v651
    %v980 = vpack.c.b16 %v660, %v656
    %v981 = vpack.c.b16 %v661, %v657
    %v982 = vpack.c.b16 %v662, %v658
    %v983 = vpack.c.b16 %v663, %v659
    %v984 = vpack.c.b16 %v668, %v664
    %v985 = vpack.c.b16 %v669, %v665
    %v986 = vpack.c.b16 %v670, %v666
    %v987 = vpack.c.b16 %v671, %v667
    %v988 = vpack.c.b16 %v676, %v672
    %v989 = vpack.c.b16 %v677, %v673
    %v990 = vpack.c.b16 %v678, %v674
    %v991 = vpack.c.b16 %v679, %v675
    %v992 = vpack.c.b16 %v684, %v680
    %v993 = vpack.c.b16 %v685, %v681
    %v994 = vpack.c.b16 %v686, %v682
    %v995 = vpack.c.b16 %v687, %v683
    %v996 = vpack.c.b16 %v692, %v688
    %v997 = vpack.c.b16 %v693, %v689
    %v998 = vpack.c.b16 %v694, %v690
    %v999 = vpack.c.b16 %v695, %v691
    %v1000 = vpack.c.b16 %v700, %v696
    %v1001 = vpack.c.b16 %v701, %v697
    %v1002 = vpack.c.b16 %v702, %v698
    %v1003 = vpack.c.b16 %v703, %v699
    %v1004 = vpack.c.b16 %v708, %v704
    %v1005 = vpack.c.b16 %v709, %v705
    %v1006 = vpack.c.b16 %v710, %v706
    %v1007 = vpack.c.b16 %v711, %v707
    %v1008 = vpack.c.b16 %v716, %v712
    %v1009 = vpack.c.b16 %v717, %v713
    %v1010 = vpack.c.b16 %v718, %v714
    %v1011 = vpack.c.b16 %v719, %v715
    %v1012 = vpack.c.b16 %v724, %v720
    %v1013 = vpack.c.b16 %v725, %v721
    %v1014 = vpack.c.b16 %v726, %v722
    %v1015 = vpack.c.b16 %v727, %v723
    %v1016 = vpack.c.b16 %v732, %v728
    %v1017 = vpack.c.b16 %v733, %v729
    %v1018 = vpack.c.b16 %v734, %v730
    %v1019 = vpack.c.b16 %v735, %v731
    %v1020 = vpack.c.b16 %v740, %v736
    %v1021 = vpack.c.b16 %v741, %v737
    %v1022 = vpack.c.b16 %v742, %v738
    %v1023 = vpack.c.b16 %v743, %v739
    %v1024 = vpack.c.b16 %v748, %v744
    %v1025 = vpack.c.b16 %v749, %v745
    %v1026 = vpack.c.b16 %v750, %v746
    %v1027 = vpack.c.b16 %v751, %v747
    %v1028 = vpack.c.b16 %v756, %v752
    %v1029 = vpack.c.b16 %v757, %v753
    %v1030 = vpack.c.b16 %v758, %v754
    %v1031 = vpack.c.b16 %v759, %v755
    %v1032 = vpack.c.b16 %v764, %v760
    %v1033 = vpack.c.b16 %v765, %v761
    %v1034 = vpack.c.b16 %v766, %v762
    %v1035 = vpack.c.b16 %v767, %v763
    %v1036 = vpack.c.b16 %v772, %v768
    %v1037 = vpack.c.b16 %v773, %v769
    %v1038 = vpack.c.b16 %v774, %v770
    %v1039 = vpack.c.b16 %v775, %v771
    %v1040 = vpack.c.b16 %v780, %v776
    %v1041 = vpack.c.b16 %v781, %v777
    %v1042 = vpack.c.b16 %v782, %v778
    %v1043 = vpack.c.b16 %v783, %v779
    %v1044 = vpack.c.b16 %v788, %v784
    %v1045 = vpack.c.b16 %v789, %v785
    %v1046 = vpack.c.b16 %v790, %v786
    %v1047 = vpack.c.b16 %v791, %v787
    %v1048 = vpack.c.b16 %v796, %v792
    %v1049 = vpack.c.b16 %v797, %v793
    %v1050 = vpack.c.b16 %v798, %v794
    %v1051 = vpack.c.b16 %v799, %v795
    %v1052 = vpack.c.b16 %v804, %v800
    %v1053 = vpack.c.b16 %v805, %v801
    %v1054 = vpack.c.b16 %v806, %v802
    %v1055 = vpack.c.b16 %v807, %v803
    %v1056 = vpack.c.b16 %v812, %v808
    %v1057 = vpack.c.b16 %v813, %v809
    %v1058 = vpack.c.b16 %v814, %v810
    %v1059 = vpack.c.b16 %v815, %v811
    %v1060 = vpack.c.b16 %v820, %v816
    %v1061 = vpack.c.b16 %v821, %v817
    %v1062 = vpack.c.b16 %v822, %v818
    %v1063 = vpack.c.b16 %v823, %v819
    %v1064 = vpack.c.b16 %v828, %v824
    %v1065 = vpack.c.b16 %v829, %v825
    %v1066 = vpack.c.b16 %v830, %v826
    %v1067 = vpack.c.b16 %v831, %v827
    %v1068 = vpack.c.b16 %v836, %v832
    %v1069 = vpack.c.b16 %v837, %v833
    %v1070 = vpack.c.b16 %v838, %v834
    %v1071 = vpack.c.b16 %v839, %v835
    %v1072 = vpack.c.b16 %v844, %v840
    %v1073 = vpack.c.b16 %v845, %v841
    %v1074 = vpack.c.b16 %v846, %v842
    %v1075 = vpack.c.b16 %v847, %v843
    %v1076 = vpack.c.b16 %v852, %v848
    %v1077 = vpack.c.b16 %v853, %v849
    %v1078 = vpack.c.b16 %v854, %v850
    %v1079 = vpack.c.b16 %v855, %v851
    %v1080 = vpack.c.b16 %v860, %v856
    %v1081 = vpack.c.b16 %v861, %v857
    %v1082 = vpack.c.b16 %v862, %v858
    %v1083 = vpack.c.b16 %v863, %v859
    %v1084 = vpack.c.b16 %v868, %v864
    %v1085 = vpack.c.b16 %v869, %v865
    %v1086 = vpack.c.b16 %v870, %v866
    %v1087 = vpack.c.b16 %v871, %v867
    %v1088 = vpack.c.b16 %v876, %v872
    %v1089 = vpack.c.b16 %v877, %v873
    %v1090 = vpack.c.b16 %v878, %v874
    %v1091 = vpack.c.b16 %v879, %v875
    %v1092 = vpack.c.b16 %v884, %v880
    %v1093 = vpack.c.b16 %v885, %v881
    %v1094 = vpack.c.b16 %v886, %v882
    %v1095 = vpack.c.b16 %v887, %v883
    %v1096 = vpack.c.b16 %v892, %v888
    %v1097 = vpack.c.b16 %v893, %v889
    %v1098 = vpack.c.b16 %v894, %v890
    %v1099 = vpack.c.b16 %v895, %v891
    %v1100 = vpack.c.b16 %v900, %v896
    %v1101 = vpack.c.b16 %v901, %v897
    %v1102 = vpack.c.b16 %v902, %v898
    %v1103 = vpack.c.b16 %v903, %v899
    %v1104 = vpack.c.b16 %v908, %v904
    %v1105 = vpack.c.b16 %v909, %v905
    %v1106 = vpack.c.b16 %v910, %v906
    %v1107 = vpack.c.b16 %v911, %v907
    %vm1304 = vcmask 130048
    %v1306 = vsel %vm1304, %v317, 0
    %1308 = vmatpush.bf16.msra.mxu0 %v940
    %1309 = vmatpush.bf16.msra.mxu0 %v936
    %1310 = vmatpush.bf16.msra.mxu0 %v932
    %1311 = vmatpush.bf16.msra.mxu0 %v928
    %1312 = vmatpush.bf16.msra.mxu0 %v924
    %1313 = vmatpush.bf16.msra.mxu0 %v920
    %1314 = vmatpush.bf16.msra.mxu0 %v916
    %1315 = vmatpush.bf16.msra.mxu0 %v912
    %1316 = vmatmul.bf16.gmra.mxu0 %v311
    %v1317 = vpop.f32.mrf.mxu0
    %v1318 = vadd.f32 0.0, %v1317
    %v1319 = vpop.f32.mrf.mxu0
    %1320 = vdwg.mxu0
    %1321 = vmatpush.bf16.msra.mxu0 %v972
    %1322 = vmatpush.bf16.msra.mxu0 %v968
    %1323 = vmatpush.bf16.msra.mxu0 %v964
    %1324 = vmatpush.bf16.msra.mxu0 %v960
    %1325 = vmatpush.bf16.msra.mxu0 %v956
    %1326 = vmatpush.bf16.msra.mxu0 %v952
    %1327 = vmatpush.bf16.msra.mxu0 %v948
    %1328 = vmatpush.bf16.msra.mxu0 %v944
    %1329 = vmatmul.bf16.gmra.mxu0 %v312
    %v1330 = vpop.f32.mrf.mxu0
    %v1331 = vadd.f32 %v1318, %v1330
    %v1332 = vpop.f32.mrf.mxu0
    %1333 = vdwg.mxu0
    %1334 = vmatpush.bf16.msra.mxu0 %v1004
    %1335 = vmatpush.bf16.msra.mxu0 %v1000
    %1336 = vmatpush.bf16.msra.mxu0 %v996
    %1337 = vmatpush.bf16.msra.mxu0 %v992
    %1338 = vmatpush.bf16.msra.mxu0 %v988
    %1339 = vmatpush.bf16.msra.mxu0 %v984
    %1340 = vmatpush.bf16.msra.mxu0 %v980
    %1341 = vmatpush.bf16.msra.mxu0 %v976
    %1342 = vmatmul.bf16.gmra.mxu0 %v313
    %v1343 = vpop.f32.mrf.mxu0
    %v1344 = vadd.f32 %v1331, %v1343
    %v1345 = vpop.f32.mrf.mxu0
    %1346 = vdwg.mxu0
    %1347 = vmatpush.bf16.msra.mxu0 %v1036
    %1348 = vmatpush.bf16.msra.mxu0 %v1032
    %1349 = vmatpush.bf16.msra.mxu0 %v1028
    %1350 = vmatpush.bf16.msra.mxu0 %v1024
    %1351 = vmatpush.bf16.msra.mxu0 %v1020
    %1352 = vmatpush.bf16.msra.mxu0 %v1016
    %1353 = vmatpush.bf16.msra.mxu0 %v1012
    %1354 = vmatpush.bf16.msra.mxu0 %v1008
    %1355 = vmatmul.bf16.gmra.mxu0 %v314
    %v1356 = vpop.f32.mrf.mxu0
    %v1357 = vadd.f32 %v1344, %v1356
    %v1358 = vpop.f32.mrf.mxu0
    %1359 = vdwg.mxu0
    %1360 = vmatpush.bf16.msra.mxu0 %v1068
    %1361 = vmatpush.bf16.msra.mxu0 %v1064
    %1362 = vmatpush.bf16.msra.mxu0 %v1060
    %1363 = vmatpush.bf16.msra.mxu0 %v1056
    %1364 = vmatpush.bf16.msra.mxu0 %v1052
    %1365 = vmatpush.bf16.msra.mxu0 %v1048
    %1366 = vmatpush.bf16.msra.mxu0 %v1044
    %1367 = vmatpush.bf16.msra.mxu0 %v1040
    %1368 = vmatmul.bf16.gmra.mxu0 %v315
    %v1369 = vpop.f32.mrf.mxu0
    %v1370 = vadd.f32 %v1357, %v1369
    %v1371 = vpop.f32.mrf.mxu0
    %1372 = vdwg.mxu0
    %1373 = vmatpush.bf16.msra.mxu0 %v1100
    %1374 = vmatpush.bf16.msra.mxu0 %v1096
    %1375 = vmatpush.bf16.msra.mxu0 %v1092
    %1376 = vmatpush.bf16.msra.mxu0 %v1088
    %1377 = vmatpush.bf16.msra.mxu0 %v1084
    %1378 = vmatpush.bf16.msra.mxu0 %v1080
    %1379 = vmatpush.bf16.msra.mxu0 %v1076
    %1380 = vmatpush.bf16.msra.mxu0 %v1072
    %1381 = vmatmul.bf16.gmra.mxu0 %v316
    %v1382 = vpop.f32.mrf.mxu0
    %v1383 = vadd.f32 %v1370, %v1382
    %v1384 = vpop.f32.mrf.mxu0
    %1385 = vdwg.mxu0
    %1386 = vmatpush.bf16.msra.mxu0 0
    %1387 = vmatpush.bf16.msra.mxu0 0
    %1388 = vmatpush.bf16.msra.mxu0 0
    %1389 = vmatpush.bf16.msra.mxu0 0
    %1390 = vmatpush.bf16.msra.mxu0 0
    %1391 = vmatpush.bf16.msra.mxu0 0
    %1392 = vmatpush.bf16.msra.mxu0 0
    %1393 = vmatpush.bf16.msra.mxu0 %v1104
    %1394 = vmatmul.bf16.gmra.mxu0 %v1306
    %v1395 = vpop.f32.mrf.mxu0
    %v1396 = vadd.f32 %v1383, %v1395
    %v1397 = vpop.f32.mrf.mxu0
    %1398 = vdwg.mxu0
    %1399 = vmatpush.bf16.msra.mxu0 %v941
    %1400 = vmatpush.bf16.msra.mxu0 %v937
    %1401 = vmatpush.bf16.msra.mxu0 %v933
    %1402 = vmatpush.bf16.msra.mxu0 %v929
    %1403 = vmatpush.bf16.msra.mxu0 %v925
    %1404 = vmatpush.bf16.msra.mxu0 %v921
    %1405 = vmatpush.bf16.msra.mxu0 %v917
    %1406 = vmatpush.bf16.msra.mxu0 %v913
    %1407 = vmatmul.bf16.gmra.mxu0 %v311
    %v1408 = vpop.f32.mrf.mxu0
    %v1409 = vadd.f32 0.0, %v1408
    %v1410 = vpop.f32.mrf.mxu0
    %1411 = vdwg.mxu0
    %1412 = vmatpush.bf16.msra.mxu0 %v973
    %1413 = vmatpush.bf16.msra.mxu0 %v969
    %1414 = vmatpush.bf16.msra.mxu0 %v965
    %1415 = vmatpush.bf16.msra.mxu0 %v961
    %1416 = vmatpush.bf16.msra.mxu0 %v957
    %1417 = vmatpush.bf16.msra.mxu0 %v953
    %1418 = vmatpush.bf16.msra.mxu0 %v949
    %1419 = vmatpush.bf16.msra.mxu0 %v945
    %1420 = vmatmul.bf16.gmra.mxu0 %v312
    %v1421 = vpop.f32.mrf.mxu0
    %v1422 = vadd.f32 %v1409, %v1421
    %v1423 = vpop.f32.mrf.mxu0
    %1424 = vdwg.mxu0
    %1425 = vmatpush.bf16.msra.mxu0 %v1005
    %1426 = vmatpush.bf16.msra.mxu0 %v1001
    %1427 = vmatpush.bf16.msra.mxu0 %v997
    %1428 = vmatpush.bf16.msra.mxu0 %v993
    %1429 = vmatpush.bf16.msra.mxu0 %v989
    %1430 = vmatpush.bf16.msra.mxu0 %v985
    %1431 = vmatpush.bf16.msra.mxu0 %v981
    %1432 = vmatpush.bf16.msra.mxu0 %v977
    %1433 = vmatmul.bf16.gmra.mxu0 %v313
    %v1434 = vpop.f32.mrf.mxu0
    %v1435 = vadd.f32 %v1422, %v1434
    %v1436 = vpop.f32.mrf.mxu0
    %1437 = vdwg.mxu0
    %1438 = vmatpush.bf16.msra.mxu0 %v1037
    %1439 = vmatpush.bf16.msra.mxu0 %v1033
    %1440 = vmatpush.bf16.msra.mxu0 %v1029
    %1441 = vmatpush.bf16.msra.mxu0 %v1025
    %1442 = vmatpush.bf16.msra.mxu0 %v1021
    %1443 = vmatpush.bf16.msra.mxu0 %v1017
    %1444 = vmatpush.bf16.msra.mxu0 %v1013
    %1445 = vmatpush.bf16.msra.mxu0 %v1009
    %1446 = vmatmul.bf16.gmra.mxu0 %v314
    %v1447 = vpop.f32.mrf.mxu0
    %v1448 = vadd.f32 %v1435, %v1447
    %v1449 = vpop.f32.mrf.mxu0
    %1450 = vdwg.mxu0
    %1451 = vmatpush.bf16.msra.mxu0 %v1069
    %1452 = vmatpush.bf16.msra.mxu0 %v1065
    %1453 = vmatpush.bf16.msra.mxu0 %v1061
    %1454 = vmatpush.bf16.msra.mxu0 %v1057
    %1455 = vmatpush.bf16.msra.mxu0 %v1053
    %1456 = vmatpush.bf16.msra.mxu0 %v1049
    %1457 = vmatpush.bf16.msra.mxu0 %v1045
    %1458 = vmatpush.bf16.msra.mxu0 %v1041
    %1459 = vmatmul.bf16.gmra.mxu0 %v315
    %v1460 = vpop.f32.mrf.mxu0
    %v1461 = vadd.f32 %v1448, %v1460
    %v1462 = vpop.f32.mrf.mxu0
    %1463 = vdwg.mxu0
    %1464 = vmatpush.bf16.msra.mxu0 %v1101
    %1465 = vmatpush.bf16.msra.mxu0 %v1097
    %1466 = vmatpush.bf16.msra.mxu0 %v1093
    %1467 = vmatpush.bf16.msra.mxu0 %v1089
    %1468 = vmatpush.bf16.msra.mxu0 %v1085
    %1469 = vmatpush.bf16.msra.mxu0 %v1081
    %1470 = vmatpush.bf16.msra.mxu0 %v1077
    %1471 = vmatpush.bf16.msra.mxu0 %v1073
    %1472 = vmatmul.bf16.gmra.mxu0 %v316
    %v1473 = vpop.f32.mrf.mxu0
    %v1474 = vadd.f32 %v1461, %v1473
    %v1475 = vpop.f32.mrf.mxu0
    %1476 = vdwg.mxu0
    %1477 = vmatpush.bf16.msra.mxu0 0
    %1478 = vmatpush.bf16.msra.mxu0 0
    %1479 = vmatpush.bf16.msra.mxu0 0
    %1480 = vmatpush.bf16.msra.mxu0 0
    %1481 = vmatpush.bf16.msra.mxu0 0
    %1482 = vmatpush.bf16.msra.mxu0 0
    %1483 = vmatpush.bf16.msra.mxu0 0
    %1484 = vmatpush.bf16.msra.mxu0 %v1105
    %1485 = vmatmul.bf16.gmra.mxu0 %v1306
    %v1486 = vpop.f32.mrf.mxu0
    %v1487 = vadd.f32 %v1474, %v1486
    %v1488 = vpop.f32.mrf.mxu0
    %1489 = vdwg.mxu0
    %1490 = vmatpush.bf16.msra.mxu0 %v942
    %1491 = vmatpush.bf16.msra.mxu0 %v938
    %1492 = vmatpush.bf16.msra.mxu0 %v934
    %1493 = vmatpush.bf16.msra.mxu0 %v930
    %1494 = vmatpush.bf16.msra.mxu0 %v926
    %1495 = vmatpush.bf16.msra.mxu0 %v922
    %1496 = vmatpush.bf16.msra.mxu0 %v918
    %1497 = vmatpush.bf16.msra.mxu0 %v914
    %1498 = vmatmul.bf16.gmra.mxu0 %v311
    %v1499 = vpop.f32.mrf.mxu0
    %v1500 = vadd.f32 0.0, %v1499
    %v1501 = vpop.f32.mrf.mxu0
    %1502 = vdwg.mxu0
    %1503 = vmatpush.bf16.msra.mxu0 %v974
    %1504 = vmatpush.bf16.msra.mxu0 %v970
    %1505 = vmatpush.bf16.msra.mxu0 %v966
    %1506 = vmatpush.bf16.msra.mxu0 %v962
    %1507 = vmatpush.bf16.msra.mxu0 %v958
    %1508 = vmatpush.bf16.msra.mxu0 %v954
    %1509 = vmatpush.bf16.msra.mxu0 %v950
    %1510 = vmatpush.bf16.msra.mxu0 %v946
    %1511 = vmatmul.bf16.gmra.mxu0 %v312
    %v1512 = vpop.f32.mrf.mxu0
    %v1513 = vadd.f32 %v1500, %v1512
    %v1514 = vpop.f32.mrf.mxu0
    %1515 = vdwg.mxu0
    %1516 = vmatpush.bf16.msra.mxu0 %v1006
    %1517 = vmatpush.bf16.msra.mxu0 %v1002
    %1518 = vmatpush.bf16.msra.mxu0 %v998
    %1519 = vmatpush.bf16.msra.mxu0 %v994
    %1520 = vmatpush.bf16.msra.mxu0 %v990
    %1521 = vmatpush.bf16.msra.mxu0 %v986
    %1522 = vmatpush.bf16.msra.mxu0 %v982
    %1523 = vmatpush.bf16.msra.mxu0 %v978
    %1524 = vmatmul.bf16.gmra.mxu0 %v313
    %v1525 = vpop.f32.mrf.mxu0
    %v1526 = vadd.f32 %v1513, %v1525
    %v1527 = vpop.f32.mrf.mxu0
    %1528 = vdwg.mxu0
    %1529 = vmatpush.bf16.msra.mxu0 %v1038
    %1530 = vmatpush.bf16.msra.mxu0 %v1034
    %1531 = vmatpush.bf16.msra.mxu0 %v1030
    %1532 = vmatpush.bf16.msra.mxu0 %v1026
    %1533 = vmatpush.bf16.msra.mxu0 %v1022
    %1534 = vmatpush.bf16.msra.mxu0 %v1018
    %1535 = vmatpush.bf16.msra.mxu0 %v1014
    %1536 = vmatpush.bf16.msra.mxu0 %v1010
    %1537 = vmatmul.bf16.gmra.mxu0 %v314
    %v1538 = vpop.f32.mrf.mxu0
    %v1539 = vadd.f32 %v1526, %v1538
    %v1540 = vpop.f32.mrf.mxu0
    %1541 = vdwg.mxu0
    %1542 = vmatpush.bf16.msra.mxu0 %v1070
    %1543 = vmatpush.bf16.msra.mxu0 %v1066
    %1544 = vmatpush.bf16.msra.mxu0 %v1062
    %1545 = vmatpush.bf16.msra.mxu0 %v1058
    %1546 = vmatpush.bf16.msra.mxu0 %v1054
    %1547 = vmatpush.bf16.msra.mxu0 %v1050
    %1548 = vmatpush.bf16.msra.mxu0 %v1046
    %1549 = vmatpush.bf16.msra.mxu0 %v1042
    %1550 = vmatmul.bf16.gmra.mxu0 %v315
    %v1551 = vpop.f32.mrf.mxu0
    %v1552 = vadd.f32 %v1539, %v1551
    %v1553 = vpop.f32.mrf.mxu0
    %1554 = vdwg.mxu0
    %1555 = vmatpush.bf16.msra.mxu0 %v1102
    %1556 = vmatpush.bf16.msra.mxu0 %v1098
    %1557 = vmatpush.bf16.msra.mxu0 %v1094
    %1558 = vmatpush.bf16.msra.mxu0 %v1090
    %1559 = vmatpush.bf16.msra.mxu0 %v1086
    %1560 = vmatpush.bf16.msra.mxu0 %v1082
    %1561 = vmatpush.bf16.msra.mxu0 %v1078
    %1562 = vmatpush.bf16.msra.mxu0 %v1074
    %1563 = vmatmul.bf16.gmra.mxu0 %v316
    %v1564 = vpop.f32.mrf.mxu0
    %v1565 = vadd.f32 %v1552, %v1564
    %v1566 = vpop.f32.mrf.mxu0
    %1567 = vdwg.mxu0
    %1568 = vmatpush.bf16.msra.mxu0 0
    %1569 = vmatpush.bf16.msra.mxu0 0
    %1570 = vmatpush.bf16.msra.mxu0 0
    %1571 = vmatpush.bf16.msra.mxu0 0
    %1572 = vmatpush.bf16.msra.mxu0 0
    %1573 = vmatpush.bf16.msra.mxu0 0
    %1574 = vmatpush.bf16.msra.mxu0 0
    %1575 = vmatpush.bf16.msra.mxu0 %v1106
    %1576 = vmatmul.bf16.gmra.mxu0 %v1306
    %v1577 = vpop.f32.mrf.mxu0
    %v1578 = vadd.f32 %v1565, %v1577
    %v1579 = vpop.f32.mrf.mxu0
    %1580 = vdwg.mxu0
    %1581 = vmatpush.bf16.msra.mxu0 %v943
    %1582 = vmatpush.bf16.msra.mxu0 %v939
    %1583 = vmatpush.bf16.msra.mxu0 %v935
    %1584 = vmatpush.bf16.msra.mxu0 %v931
    %1585 = vmatpush.bf16.msra.mxu0 %v927
    %1586 = vmatpush.bf16.msra.mxu0 %v923
    %1587 = vmatpush.bf16.msra.mxu0 %v919
    %1588 = vmatpush.bf16.msra.mxu0 %v915
    %1589 = vmatmul.bf16.gmra.mxu0 %v311
    %v1590 = vpop.f32.mrf.mxu0
    %v1591 = vadd.f32 0.0, %v1590
    %v1592 = vpop.f32.mrf.mxu0
    %1593 = vdwg.mxu0
    %1594 = vmatpush.bf16.msra.mxu0 %v975
    %1595 = vmatpush.bf16.msra.mxu0 %v971
    %1596 = vmatpush.bf16.msra.mxu0 %v967
    %1597 = vmatpush.bf16.msra.mxu0 %v963
    %1598 = vmatpush.bf16.msra.mxu0 %v959
    %1599 = vmatpush.bf16.msra.mxu0 %v955
    %1600 = vmatpush.bf16.msra.mxu0 %v951
    %1601 = vmatpush.bf16.msra.mxu0 %v947
    %1602 = vmatmul.bf16.gmra.mxu0 %v312
    %v1603 = vpop.f32.mrf.mxu0
    %v1604 = vadd.f32 %v1591, %v1603
    %v1605 = vpop.f32.mrf.mxu0
    %1606 = vdwg.mxu0
    %1607 = vmatpush.bf16.msra.mxu0 %v1007
    %1608 = vmatpush.bf16.msra.mxu0 %v1003
    %1609 = vmatpush.bf16.msra.mxu0 %v999
    %1610 = vmatpush.bf16.msra.mxu0 %v995
    %1611 = vmatpush.bf16.msra.mxu0 %v991
    %1612 = vmatpush.bf16.msra.mxu0 %v987
    %1613 = vmatpush.bf16.msra.mxu0 %v983
    %1614 = vmatpush.bf16.msra.mxu0 %v979
    %1615 = vmatmul.bf16.gmra.mxu0 %v313
    %v1616 = vpop.f32.mrf.mxu0
    %v1617 = vadd.f32 %v1604, %v1616
    %v1618 = vpop.f32.mrf.mxu0
    %1619 = vdwg.mxu0
    %1620 = vmatpush.bf16.msra.mxu0 %v1039
    %1621 = vmatpush.bf16.msra.mxu0 %v1035
    %1622 = vmatpush.bf16.msra.mxu0 %v1031
    %1623 = vmatpush.bf16.msra.mxu0 %v1027
    %1624 = vmatpush.bf16.msra.mxu0 %v1023
    %1625 = vmatpush.bf16.msra.mxu0 %v1019
    %1626 = vmatpush.bf16.msra.mxu0 %v1015
    %1627 = vmatpush.bf16.msra.mxu0 %v1011
    %1628 = vmatmul.bf16.gmra.mxu0 %v314
    %v1629 = vpop.f32.mrf.mxu0
    %v1630 = vadd.f32 %v1617, %v1629
    %v1631 = vpop.f32.mrf.mxu0
    %1632 = vdwg.mxu0
    %1633 = vmatpush.bf16.msra.mxu0 %v1071
    %1634 = vmatpush.bf16.msra.mxu0 %v1067
    %1635 = vmatpush.bf16.msra.mxu0 %v1063
    %1636 = vmatpush.bf16.msra.mxu0 %v1059
    %1637 = vmatpush.bf16.msra.mxu0 %v1055
    %1638 = vmatpush.bf16.msra.mxu0 %v1051
    %1639 = vmatpush.bf16.msra.mxu0 %v1047
    %1640 = vmatpush.bf16.msra.mxu0 %v1043
    %1641 = vmatmul.bf16.gmra.mxu0 %v315
    %v1642 = vpop.f32.mrf.mxu0
    %v1643 = vadd.f32 %v1630, %v1642
    %v1644 = vpop.f32.mrf.mxu0
    %1645 = vdwg.mxu0
    %1646 = vmatpush.bf16.msra.mxu0 %v1103
    %1647 = vmatpush.bf16.msra.mxu0 %v1099
    %1648 = vmatpush.bf16.msra.mxu0 %v1095
    %1649 = vmatpush.bf16.msra.mxu0 %v1091
    %1650 = vmatpush.bf16.msra.mxu0 %v1087
    %1651 = vmatpush.bf16.msra.mxu0 %v1083
    %1652 = vmatpush.bf16.msra.mxu0 %v1079
    %1653 = vmatpush.bf16.msra.mxu0 %v1075
    %1654 = vmatmul.bf16.gmra.mxu0 %v316
    %v1655 = vpop.f32.mrf.mxu0
    %v1656 = vadd.f32 %v1643, %v1655
    %v1657 = vpop.f32.mrf.mxu0
    %1658 = vdwg.mxu0
    %1659 = vmatpush.bf16.msra.mxu0 0
    %1660 = vmatpush.bf16.msra.mxu0 0
    %1661 = vmatpush.bf16.msra.mxu0 0
    %1662 = vmatpush.bf16.msra.mxu0 0
    %1663 = vmatpush.bf16.msra.mxu0 0
    %1664 = vmatpush.bf16.msra.mxu0 0
    %1665 = vmatpush.bf16.msra.mxu0 0
    %1666 = vmatpush.bf16.msra.mxu0 %v1107
    %1667 = vmatmul.bf16.gmra.mxu0 %v1306
    %v1668 = vpop.f32.mrf.mxu0
    %v1669 = vadd.f32 %v1656, %v1668
    %v1670 = vpop.f32.mrf.mxu0
    %1671 = vdwg.mxu0
    %v1672 = vrot.slane %v1396, 4
    %v1673 = vadd.f32 %v1396, %v1672
    %v1674 = vrot.slane %v1673, 2
    %v1675 = vadd.f32 %v1673, %v1674
    %v1676 = vrot.slane %v1675, 1
    %v1677 = vadd.f32 %v1675, %v1676
    %v1678 = vrot.slane %v1487, 4
    %v1679 = vadd.f32 %v1487, %v1678
    %v1680 = vrot.slane %v1679, 2
    %v1681 = vadd.f32 %v1679, %v1680
    %v1682 = vrot.slane %v1681, 1
    %v1683 = vadd.f32 %v1681, %v1682
    %v1684 = vrot.slane %v1578, 4
    %v1685 = vadd.f32 %v1578, %v1684
    %v1686 = vrot.slane %v1685, 2
    %v1687 = vadd.f32 %v1685, %v1686
    %v1688 = vrot.slane %v1687, 1
    %v1689 = vadd.f32 %v1687, %v1688
    %v1690 = vrot.slane %v1669, 4
    %v1691 = vadd.f32 %v1669, %v1690
    %v1692 = vrot.slane %v1691, 2
    %v1693 = vadd.f32 %v1691, %v1692
    %v1694 = vrot.slane %v1693, 1
    %v1695 = vadd.f32 %v1693, %v1694
    %v1696 = vrcp.pop 8.0
    %v1697 = vmul.f32 8.0, %v1696
    %v1698 = vsub.f32 1.0, %v1697
    %v1699 = vmul.f32 %v1696, %v1698
    %v1700 = vadd.f32 %v1696, %v1699
    %vm1701 = vweird.f32 %v1696
    %v1702 = vsel %vm1701, %v1696, %v1700
    %v1703 = vmul.f32 %v1677, %v1702
    %v1704 = vmul.f32 %v1683, %v1702
    %v1705 = vmul.f32 %v1689, %v1702
    %v1706 = vmul.f32 %v1695, %v1702
    %v1707 = vmul.f32 %v1396, %v1396
    %v1708 = vmul.f32 %v1487, %v1487
    %v1709 = vmul.f32 %v1578, %v1578
    %v1710 = vmul.f32 %v1669, %v1669
    %v1711 = vrot.slane %v1707, 4
    %v1712 = vadd.f32 %v1707, %v1711
    %v1713 = vrot.slane %v1712, 2
    %v1714 = vadd.f32 %v1712, %v1713
    %v1715 = vrot.slane %v1714, 1
    %v1716 = vadd.f32 %v1714, %v1715
    %v1717 = vrot.slane %v1708, 4
    %v1718 = vadd.f32 %v1708, %v1717
    %v1719 = vrot.slane %v1718, 2
    %v1720 = vadd.f32 %v1718, %v1719
    %v1721 = vrot.slane %v1720, 1
    %v1722 = vadd.f32 %v1720, %v1721
    %v1723 = vrot.slane %v1709, 4
    %v1724 = vadd.f32 %v1709, %v1723
    %v1725 = vrot.slane %v1724, 2
    %v1726 = vadd.f32 %v1724, %v1725
    %v1727 = vrot.slane %v1726, 1
    %v1728 = vadd.f32 %v1726, %v1727
    %v1729 = vrot.slane %v1710, 4
    %v1730 = vadd.f32 %v1710, %v1729
    %v1731 = vrot.slane %v1730, 2
    %v1732 = vadd.f32 %v1730, %v1731
    %v1733 = vrot.slane %v1732, 1
    %v1734 = vadd.f32 %v1732, %v1733
    %v1735 = vmul.f32 %v1716, %v1702
    %v1736 = vmul.f32 %v1722, %v1702
    %v1737 = vmul.f32 %v1728, %v1702
    %v1738 = vmul.f32 %v1734, %v1702
    %v1739 = vmul.f32 %v1703, %v1703
    %v1740 = vmul.f32 %v1704, %v1704
    %v1741 = vmul.f32 %v1705, %v1705
    %v1742 = vmul.f32 %v1706, %v1706
    %v1743 = vsub.f32 %v1735, %v1739
    %v1744 = vsub.f32 %v1736, %v1740
    %v1745 = vsub.f32 %v1737, %v1741
    %v1746 = vsub.f32 %v1738, %v1742
    %v1747 = vmax.f32 %v1743, 0.0
    %v1748 = vmax.f32 %v1744, 0.0
    %v1749 = vmax.f32 %v1745, 0.0
    %v1750 = vmax.f32 %v1746, 0.0
    %v1751 = vadd.f32 %v1747, 1e-05
    %v1752 = vadd.f32 %v1748, 1e-05
    %v1753 = vadd.f32 %v1749, 1e-05
    %v1754 = vadd.f32 %v1750, 1e-05
    %v1755 = vrsqrt.pop %v1751
    %v1756 = vmul.f32 %v1755, %v1751
    %v1757 = vmul.f32 %v1756, %v1755
    %v1758 = vmul.f32 0.5, %v1757
    %v1759 = vsub.f32 1.5, %v1758
    %v1760 = vmul.f32 %v1755, %v1759
    %vm1761 = vweird.f32 %v1751
    %vm1762 = vweird.f32 %v1755
    %vm1763 = vmor %vm1761, %vm1762
    %v1764 = vsel %vm1763, %v1755, %v1760
    %v1765 = vrsqrt.pop %v1752
    %v1766 = vmul.f32 %v1765, %v1752
    %v1767 = vmul.f32 %v1766, %v1765
    %v1768 = vmul.f32 0.5, %v1767
    %v1769 = vsub.f32 1.5, %v1768
    %v1770 = vmul.f32 %v1765, %v1769
    %vm1771 = vweird.f32 %v1752
    %vm1772 = vweird.f32 %v1765
    %vm1773 = vmor %vm1771, %vm1772
    %v1774 = vsel %vm1773, %v1765, %v1770
    %v1775 = vrsqrt.pop %v1753
    %v1776 = vmul.f32 %v1775, %v1753
    %v1777 = vmul.f32 %v1776, %v1775
    %v1778 = vmul.f32 0.5, %v1777
    %v1779 = vsub.f32 1.5, %v1778
    %v1780 = vmul.f32 %v1775, %v1779
    %vm1781 = vweird.f32 %v1753
    %vm1782 = vweird.f32 %v1775
    %vm1783 = vmor %vm1781, %vm1782
    %v1784 = vsel %vm1783, %v1775, %v1780
    %v1785 = vrsqrt.pop %v1754
    %v1786 = vmul.f32 %v1785, %v1754
    %v1787 = vmul.f32 %v1786, %v1785
    %v1788 = vmul.f32 0.5, %v1787
    %v1789 = vsub.f32 1.5, %v1788
    %v1790 = vmul.f32 %v1785, %v1789
    %vm1791 = vweird.f32 %v1754
    %vm1792 = vweird.f32 %v1785
    %vm1793 = vmor %vm1791, %vm1792
    %v1794 = vsel %vm1793, %v1785, %v1790
    %v1795 = vmul.f32 %v100, %v1764
    %v1796 = vmul.f32 %v101, %v1774
    %v1797 = vmul.f32 %v102, %v1784
    %v1798 = vmul.f32 %v103, %v1794
    %v1799 = vmul.f32 %v1703, %v1795
    %v1800 = vmul.f32 %v1704, %v1796
    %v1801 = vmul.f32 %v1705, %v1797
    %v1802 = vmul.f32 %v1706, %v1798
    %v1807 = vrot.slane %v1799, 7
    %v1808 = vrot.slane %v1800, 7
    %v1809 = vrot.slane %v1801, 7
    %v1810 = vrot.slane %v1802, 7
    %v1815 = vsub.f32 %v100, %v1807
    %v1816 = vsub.f32 %v101, %v1808
    %v1817 = vsub.f32 %v102, %v1809
    %v1818 = vsub.f32 %v103, %v1810
    %v1819 = vperm.slane %v1795, 0
    %v1820 = vperm.slane %v1796, 0
    %v1821 = vperm.slane %v1797, 0
    %v1822 = vperm.slane %v1798, 0
    %v1823 = vmul.f32 %v1396, %v1819
    %v1824 = vmul.f32 %v1487, %v1820
    %v1825 = vmul.f32 %v1578, %v1821
    %v1826 = vmul.f32 %v1669, %v1822
    %v1827 = vperm.slane %v1815, 1
    %v1828 = vperm.slane %v1816, 1
    %v1829 = vperm.slane %v1817, 1
    %v1830 = vperm.slane %v1818, 1
    %v1831 = vadd.f32 %v1823, %v1827
    %v1832 = vadd.f32 %v1824, %v1828
    %v1833 = vadd.f32 %v1825, %v1829
    %v1834 = vadd.f32 %v1826, %v1830
    %v1835 = vmax.f32 %v1831, 0.0
    %v1836 = vmax.f32 %v1832, 0.0
    %v1837 = vmax.f32 %v1833, 0.0
    %v1838 = vmax.f32 %v1834, 0.0
    %v1839 = vpack.c.bf16 %v1835, %v1835
    %v1840 = vpack.c.bf16 %v1836, %v1836
    %v1841 = vpack.c.bf16 %v1837, %v1837
    %v1842 = vpack.c.bf16 %v1838, %v1838
    %v1843 = vld [vmem:[#allocation7] sm:$0xff]
    %v1844 = vld [vmem:[#allocation7 + $0x8] sm:$0xff]
    %v1845 = vld [vmem:[#allocation7 + $0x10] sm:$0xff]
    %v1846 = vld [vmem:[#allocation7 + $0x18] sm:$0xff]
    %v1847 = vld [vmem:[#allocation7 + $0x20] sm:$0xff]
    %v1848 = vld [vmem:[#allocation7 + $0x28] sm:$0xff]
    %v1849 = vld [vmem:[#allocation7 + $0x30] sm:$0xff]
    %v1850 = vld [vmem:[#allocation7 + $0x38] sm:$0xff]
    %v1851 = vld [vmem:[#allocation7 + $0x40] sm:$0xff]
    %v1852 = vld [vmem:[#allocation7 + $0x48] sm:$0xff]
    %v1853 = vld [vmem:[#allocation7 + $0x50] sm:$0xff]
    %v1854 = vld [vmem:[#allocation7 + $0x58] sm:$0xff]
    %v1855 = vld [vmem:[#allocation7 + $0x60] sm:$0xff]
    %v1856 = vld [vmem:[#allocation7 + $0x68] sm:$0xff]
    %v1857 = vld [vmem:[#allocation7 + $0x70] sm:$0xff]
    %v1858 = vld [vmem:[#allocation7 + $0x78] sm:$0xff]
    %v1859 = vld [vmem:[#allocation7 + $0x80] sm:$0xff]
    %v1860 = vld [vmem:[#allocation7 + $0x88] sm:$0xff]
    %v1861 = vld [vmem:[#allocation7 + $0x90] sm:$0xff]
    %v1862 = vld [vmem:[#allocation7 + $0x98] sm:$0xff]
    %v1863 = vld [vmem:[#allocation7 + $0xa0] sm:$0xff]
    %v1864 = vld [vmem:[#allocation7 + $0xa8] sm:$0xff]
    %v1865 = vld [vmem:[#allocation7 + $0xb0] sm:$0xff]
    %v1866 = vld [vmem:[#allocation7 + $0xb8] sm:$0xff]
    %v1867 = vld [vmem:[#allocation7 + $0xc0] sm:$0xff]
    %v1868 = vld [vmem:[#allocation7 + $0xc8] sm:$0xff]
    %v1869 = vld [vmem:[#allocation7 + $0xd0] sm:$0xff]
    %v1870 = vld [vmem:[#allocation7 + $0xd8] sm:$0xff]
    %v1871 = vld [vmem:[#allocation7 + $0xe0] sm:$0xff]
    %v1872 = vld [vmem:[#allocation7 + $0xe8] sm:$0xff]
    %v1873 = vld [vmem:[#allocation7 + $0xf0] sm:$0xff]
    %v1874 = vld [vmem:[#allocation7 + $0xf8] sm:$0xff]
    %v1875 = vld [vmem:[#allocation7 + $0x100] sm:$0xff]
    %v1876 = vld [vmem:[#allocation7 + $0x108] sm:$0xff]
    %v1877 = vld [vmem:[#allocation7 + $0x110] sm:$0xff]
    %v1878 = vld [vmem:[#allocation7 + $0x118] sm:$0xff]
    %v1879 = vld [vmem:[#allocation7 + $0x120] sm:$0xff]
    %v1880 = vld [vmem:[#allocation7 + $0x128] sm:$0xff]
    %v1881 = vld [vmem:[#allocation7 + $0x130] sm:$0xff]
    %v1882 = vld [vmem:[#allocation7 + $0x138] sm:$0xff]
    %v1883 = vld [vmem:[#allocation7 + $0x140] sm:$0xff]
    %v1884 = vld [vmem:[#allocation7 + $0x148] sm:$0xff]
    %v1885 = vld [vmem:[#allocation7 + $0x150] sm:$0xff]
    %v1886 = vld [vmem:[#allocation7 + $0x158] sm:$0xff]
    %v1887 = vld [vmem:[#allocation7 + $0x160] sm:$0xff]
    %v1888 = vld [vmem:[#allocation7 + $0x168] sm:$0xff]
    %v1889 = vld [vmem:[#allocation7 + $0x170] sm:$0xff]
    %v1890 = vld [vmem:[#allocation7 + $0x178] sm:$0xff]
    %v1891 = vld [vmem:[#allocation7 + $0x180] sm:$0xff]
    %v1892 = vld [vmem:[#allocation7 + $0x188] sm:$0xff]
    %v1893 = vld [vmem:[#allocation7 + $0x190] sm:$0xff]
    %v1894 = vld [vmem:[#allocation7 + $0x198] sm:$0xff]
    %v1895 = vld [vmem:[#allocation7 + $0x1a0] sm:$0xff]
    %v1896 = vld [vmem:[#allocation7 + $0x1a8] sm:$0xff]
    %v1897 = vld [vmem:[#allocation7 + $0x1b0] sm:$0xff]
    %v1898 = vld [vmem:[#allocation7 + $0x1b8] sm:$0xff]
    %v1899 = vld [vmem:[#allocation7 + $0x1c0] sm:$0xff]
    %v1900 = vld [vmem:[#allocation7 + $0x1c8] sm:$0xff]
    %v1901 = vld [vmem:[#allocation7 + $0x1d0] sm:$0xff]
    %v1902 = vld [vmem:[#allocation7 + $0x1d8] sm:$0xff]
    %v1903 = vld [vmem:[#allocation7 + $0x1e0] sm:$0xff]
    %v1904 = vld [vmem:[#allocation7 + $0x1e8] sm:$0xff]
    %v1905 = vld [vmem:[#allocation7 + $0x1f0] sm:$0xff]
    %v1906 = vld [vmem:[#allocation7 + $0x1f8] sm:$0xff]
    %v1971 = vunpack.c.l.b16 %v1843
    %v1972 = vunpack.c.h.b16 %v1843
    %v1973 = vunpack.c.l.b16 %v1844
    %v1974 = vunpack.c.h.b16 %v1844
    %v1975 = vunpack.c.l.b16 %v1845
    %v1976 = vunpack.c.h.b16 %v1845
    %v1977 = vunpack.c.l.b16 %v1846
    %v1978 = vunpack.c.h.b16 %v1846
    %v1979 = vunpack.c.l.b16 %v1847
    %v1980 = vunpack.c.h.b16 %v1847
    %v1981 = vunpack.c.l.b16 %v1848
    %v1982 = vunpack.c.h.b16 %v1848
    %v1983 = vunpack.c.l.b16 %v1849
    %v1984 = vunpack.c.h.b16 %v1849
    %v1985 = vunpack.c.l.b16 %v1850
    %v1986 = vunpack.c.h.b16 %v1850
    %v1987 = vunpack.c.l.b16 %v1851
    %v1988 = vunpack.c.h.b16 %v1851
    %v1989 = vunpack.c.l.b16 %v1852
    %v1990 = vunpack.c.h.b16 %v1852
    %v1991 = vunpack.c.l.b16 %v1853
    %v1992 = vunpack.c.h.b16 %v1853
    %v1993 = vunpack.c.l.b16 %v1854
    %v1994 = vunpack.c.h.b16 %v1854
    %v1995 = vunpack.c.l.b16 %v1855
    %v1996 = vunpack.c.h.b16 %v1855
    %v1997 = vunpack.c.l.b16 %v1856
    %v1998 = vunpack.c.h.b16 %v1856
    %v1999 = vunpack.c.l.b16 %v1857
    %v2000 = vunpack.c.h.b16 %v1857
    %v2001 = vunpack.c.l.b16 %v1858
    %v2002 = vunpack.c.h.b16 %v1858
    %v2003 = vunpack.c.l.b16 %v1859
    %v2004 = vunpack.c.h.b16 %v1859
    %v2005 = vunpack.c.l.b16 %v1860
    %v2006 = vunpack.c.h.b16 %v1860
    %v2007 = vunpack.c.l.b16 %v1861
    %v2008 = vunpack.c.h.b16 %v1861
    %v2009 = vunpack.c.l.b16 %v1862
    %v2010 = vunpack.c.h.b16 %v1862
    %v2011 = vunpack.c.l.b16 %v1863
    %v2012 = vunpack.c.h.b16 %v1863
    %v2013 = vunpack.c.l.b16 %v1864
    %v2014 = vunpack.c.h.b16 %v1864
    %v2015 = vunpack.c.l.b16 %v1865
    %v2016 = vunpack.c.h.b16 %v1865
    %v2017 = vunpack.c.l.b16 %v1866
    %v2018 = vunpack.c.h.b16 %v1866
    %v2019 = vunpack.c.l.b16 %v1867
    %v2020 = vunpack.c.h.b16 %v1867
    %v2021 = vunpack.c.l.b16 %v1868
    %v2022 = vunpack.c.h.b16 %v1868
    %v2023 = vunpack.c.l.b16 %v1869
    %v2024 = vunpack.c.h.b16 %v1869
    %v2025 = vunpack.c.l.b16 %v1870
    %v2026 = vunpack.c.h.b16 %v1870
    %v2027 = vunpack.c.l.b16 %v1871
    %v2028 = vunpack.c.h.b16 %v1871
    %v2029 = vunpack.c.l.b16 %v1872
    %v2030 = vunpack.c.h.b16 %v1872
    %v2031 = vunpack.c.l.b16 %v1873
    %v2032 = vunpack.c.h.b16 %v1873
    %v2033 = vunpack.c.l.b16 %v1874
    %v2034 = vunpack.c.h.b16 %v1874
    %v2035 = vunpack.c.l.b16 %v1875
    %v2036 = vunpack.c.h.b16 %v1875
    %v2037 = vunpack.c.l.b16 %v1876
    %v2038 = vunpack.c.h.b16 %v1876
    %v2039 = vunpack.c.l.b16 %v1877
    %v2040 = vunpack.c.h.b16 %v1877
    %v2041 = vunpack.c.l.b16 %v1878
    %v2042 = vunpack.c.h.b16 %v1878
    %v2043 = vunpack.c.l.b16 %v1879
    %v2044 = vunpack.c.h.b16 %v1879
    %v2045 = vunpack.c.l.b16 %v1880
    %v2046 = vunpack.c.h.b16 %v1880
    %v2047 = vunpack.c.l.b16 %v1881
    %v2048 = vunpack.c.h.b16 %v1881
    %v2049 = vunpack.c.l.b16 %v1882
    %v2050 = vunpack.c.h.b16 %v1882
    %v2051 = vunpack.c.l.b16 %v1883
    %v2052 = vunpack.c.h.b16 %v1883
    %v2053 = vunpack.c.l.b16 %v1884
    %v2054 = vunpack.c.h.b16 %v1884
    %v2055 = vunpack.c.l.b16 %v1885
    %v2056 = vunpack.c.h.b16 %v1885
    %v2057 = vunpack.c.l.b16 %v1886
    %v2058 = vunpack.c.h.b16 %v1886
    %v2059 = vunpack.c.l.b16 %v1887
    %v2060 = vunpack.c.h.b16 %v1887
    %v2061 = vunpack.c.l.b16 %v1888
    %v2062 = vunpack.c.h.b16 %v1888
    %v2063 = vunpack.c.l.b16 %v1889
    %v2064 = vunpack.c.h.b16 %v1889
    %v2065 = vunpack.c.l.b16 %v1890
    %v2066 = vunpack.c.h.b16 %v1890
    %v2067 = vunpack.c.l.b16 %v1891
    %v2068 = vunpack.c.h.b16 %v1891
    %v2069 = vunpack.c.l.b16 %v1892
    %v2070 = vunpack.c.h.b16 %v1892
    %v2071 = vunpack.c.l.b16 %v1893
    %v2072 = vunpack.c.h.b16 %v1893
    %v2073 = vunpack.c.l.b16 %v1894
    %v2074 = vunpack.c.h.b16 %v1894
    %v2075 = vunpack.c.l.b16 %v1895
    %v2076 = vunpack.c.h.b16 %v1895
    %v2077 = vunpack.c.l.b16 %v1896
    %v2078 = vunpack.c.h.b16 %v1896
    %v2079 = vunpack.c.l.b16 %v1897
    %v2080 = vunpack.c.h.b16 %v1897
    %v2081 = vunpack.c.l.b16 %v1898
    %v2082 = vunpack.c.h.b16 %v1898
    %v2083 = vunpack.c.l.b16 %v1899
    %v2084 = vunpack.c.h.b16 %v1899
    %v2085 = vunpack.c.l.b16 %v1900
    %v2086 = vunpack.c.h.b16 %v1900
    %v2087 = vunpack.c.l.b16 %v1901
    %v2088 = vunpack.c.h.b16 %v1901
    %v2089 = vunpack.c.l.b16 %v1902
    %v2090 = vunpack.c.h.b16 %v1902
    %v2091 = vunpack.c.l.b16 %v1903
    %v2092 = vunpack.c.h.b16 %v1903
    %v2093 = vunpack.c.l.b16 %v1904
    %v2094 = vunpack.c.h.b16 %v1904
    %v2095 = vunpack.c.l.b16 %v1905
    %v2096 = vunpack.c.h.b16 %v1905
    %v2097 = vunpack.c.l.b16 %v1906
    %v2098 = vunpack.c.h.b16 %v1906
    %v2099 = vpack.c.b16 %v1973, %v1971
    %v2100 = vpack.c.b16 %v1974, %v1972
    %v2101 = vpack.c.b16 %v1977, %v1975
    %v2102 = vpack.c.b16 %v1978, %v1976
    %v2103 = vpack.c.b16 %v1981, %v1979
    %v2104 = vpack.c.b16 %v1982, %v1980
    %v2105 = vpack.c.b16 %v1985, %v1983
    %v2106 = vpack.c.b16 %v1986, %v1984
    %v2107 = vpack.c.b16 %v1989, %v1987
    %v2108 = vpack.c.b16 %v1990, %v1988
    %v2109 = vpack.c.b16 %v1993, %v1991
    %v2110 = vpack.c.b16 %v1994, %v1992
    %v2111 = vpack.c.b16 %v1997, %v1995
    %v2112 = vpack.c.b16 %v1998, %v1996
    %v2113 = vpack.c.b16 %v2001, %v1999
    %v2114 = vpack.c.b16 %v2002, %v2000
    %v2115 = vpack.c.b16 %v2005, %v2003
    %v2116 = vpack.c.b16 %v2006, %v2004
    %v2117 = vpack.c.b16 %v2009, %v2007
    %v2118 = vpack.c.b16 %v2010, %v2008
    %v2119 = vpack.c.b16 %v2013, %v2011
    %v2120 = vpack.c.b16 %v2014, %v2012
    %v2121 = vpack.c.b16 %v2017, %v2015
    %v2122 = vpack.c.b16 %v2018, %v2016
    %v2123 = vpack.c.b16 %v2021, %v2019
    %v2124 = vpack.c.b16 %v2022, %v2020
    %v2125 = vpack.c.b16 %v2025, %v2023
    %v2126 = vpack.c.b16 %v2026, %v2024
    %v2127 = vpack.c.b16 %v2029, %v2027
    %v2128 = vpack.c.b16 %v2030, %v2028
    %v2129 = vpack.c.b16 %v2033, %v2031
    %v2130 = vpack.c.b16 %v2034, %v2032
    %v2131 = vpack.c.b16 %v2037, %v2035
    %v2132 = vpack.c.b16 %v2038, %v2036
    %v2133 = vpack.c.b16 %v2041, %v2039
    %v2134 = vpack.c.b16 %v2042, %v2040
    %v2135 = vpack.c.b16 %v2045, %v2043
    %v2136 = vpack.c.b16 %v2046, %v2044
    %v2137 = vpack.c.b16 %v2049, %v2047
    %v2138 = vpack.c.b16 %v2050, %v2048
    %v2139 = vpack.c.b16 %v2053, %v2051
    %v2140 = vpack.c.b16 %v2054, %v2052
    %v2141 = vpack.c.b16 %v2057, %v2055
    %v2142 = vpack.c.b16 %v2058, %v2056
    %v2143 = vpack.c.b16 %v2061, %v2059
    %v2144 = vpack.c.b16 %v2062, %v2060
    %v2145 = vpack.c.b16 %v2065, %v2063
    %v2146 = vpack.c.b16 %v2066, %v2064
    %v2147 = vpack.c.b16 %v2069, %v2067
    %v2148 = vpack.c.b16 %v2070, %v2068
    %v2149 = vpack.c.b16 %v2073, %v2071
    %v2150 = vpack.c.b16 %v2074, %v2072
    %v2151 = vpack.c.b16 %v2077, %v2075
    %v2152 = vpack.c.b16 %v2078, %v2076
    %v2153 = vpack.c.b16 %v2081, %v2079
    %v2154 = vpack.c.b16 %v2082, %v2080
    %v2155 = vpack.c.b16 %v2085, %v2083
    %v2156 = vpack.c.b16 %v2086, %v2084
    %v2157 = vpack.c.b16 %v2089, %v2087
    %v2158 = vpack.c.b16 %v2090, %v2088
    %v2159 = vpack.c.b16 %v2093, %v2091
    %v2160 = vpack.c.b16 %v2094, %v2092
    %v2161 = vpack.c.b16 %v2097, %v2095
    %v2162 = vpack.c.b16 %v2098, %v2096
    %2227 = vmatpush.bf16.msra.mxu0 %v2113
    %2228 = vmatpush.bf16.msra.mxu0 %v2111
    %2229 = vmatpush.bf16.msra.mxu0 %v2109
    %2230 = vmatpush.bf16.msra.mxu0 %v2107
    %2231 = vmatpush.bf16.msra.mxu0 %v2105
    %2232 = vmatpush.bf16.msra.mxu0 %v2103
    %2233 = vmatpush.bf16.msra.mxu0 %v2101
    %2234 = vmatpush.bf16.msra.mxu0 %v2099
    %2235 = vmatmul.bf16.gmra.mxu0 %v1839
    %v2236 = vpop.f32.mrf.mxu0
    %v2237 = vadd.f32 0.0, %v2236
    %v2238 = vpop.f32.mrf.mxu0
    %2239 = vdwg.mxu0
    %2240 = vmatpush.bf16.msra.mxu0 %v2129
    %2241 = vmatpush.bf16.msra.mxu0 %v2127
    %2242 = vmatpush.bf16.msra.mxu0 %v2125
    %2243 = vmatpush.bf16.msra.mxu0 %v2123
    %2244 = vmatpush.bf16.msra.mxu0 %v2121
    %2245 = vmatpush.bf16.msra.mxu0 %v2119
    %2246 = vmatpush.bf16.msra.mxu0 %v2117
    %2247 = vmatpush.bf16.msra.mxu0 %v2115
    %2248 = vmatmul.bf16.gmra.mxu0 %v1840
    %v2249 = vpop.f32.mrf.mxu0
    %v2250 = vadd.f32 %v2237, %v2249
    %v2251 = vpop.f32.mrf.mxu0
    %2252 = vdwg.mxu0
    %2253 = vmatpush.bf16.msra.mxu0 %v2145
    %2254 = vmatpush.bf16.msra.mxu0 %v2143
    %2255 = vmatpush.bf16.msra.mxu0 %v2141
    %2256 = vmatpush.bf16.msra.mxu0 %v2139
    %2257 = vmatpush.bf16.msra.mxu0 %v2137
    %2258 = vmatpush.bf16.msra.mxu0 %v2135
    %2259 = vmatpush.bf16.msra.mxu0 %v2133
    %2260 = vmatpush.bf16.msra.mxu0 %v2131
    %2261 = vmatmul.bf16.gmra.mxu0 %v1841
    %v2262 = vpop.f32.mrf.mxu0
    %v2263 = vadd.f32 %v2250, %v2262
    %v2264 = vpop.f32.mrf.mxu0
    %2265 = vdwg.mxu0
    %2266 = vmatpush.bf16.msra.mxu0 %v2161
    %2267 = vmatpush.bf16.msra.mxu0 %v2159
    %2268 = vmatpush.bf16.msra.mxu0 %v2157
    %2269 = vmatpush.bf16.msra.mxu0 %v2155
    %2270 = vmatpush.bf16.msra.mxu0 %v2153
    %2271 = vmatpush.bf16.msra.mxu0 %v2151
    %2272 = vmatpush.bf16.msra.mxu0 %v2149
    %2273 = vmatpush.bf16.msra.mxu0 %v2147
    %2274 = vmatmul.bf16.gmra.mxu0 %v1842
    %v2275 = vpop.f32.mrf.mxu0
    %v2276 = vadd.f32 %v2263, %v2275
    %v2277 = vpop.f32.mrf.mxu0
    %2278 = vdwg.mxu0
    %2279 = vmatpush.bf16.msra.mxu0 %v2114
    %2280 = vmatpush.bf16.msra.mxu0 %v2112
    %2281 = vmatpush.bf16.msra.mxu0 %v2110
    %2282 = vmatpush.bf16.msra.mxu0 %v2108
    %2283 = vmatpush.bf16.msra.mxu0 %v2106
    %2284 = vmatpush.bf16.msra.mxu0 %v2104
    %2285 = vmatpush.bf16.msra.mxu0 %v2102
    %2286 = vmatpush.bf16.msra.mxu0 %v2100
    %2287 = vmatmul.bf16.gmra.mxu0 %v1839
    %v2288 = vpop.f32.mrf.mxu0
    %v2289 = vadd.f32 0.0, %v2288
    %v2290 = vpop.f32.mrf.mxu0
    %2291 = vdwg.mxu0
    %2292 = vmatpush.bf16.msra.mxu0 %v2130
    %2293 = vmatpush.bf16.msra.mxu0 %v2128
    %2294 = vmatpush.bf16.msra.mxu0 %v2126
    %2295 = vmatpush.bf16.msra.mxu0 %v2124
    %2296 = vmatpush.bf16.msra.mxu0 %v2122
    %2297 = vmatpush.bf16.msra.mxu0 %v2120
    %2298 = vmatpush.bf16.msra.mxu0 %v2118
    %2299 = vmatpush.bf16.msra.mxu0 %v2116
    %2300 = vmatmul.bf16.gmra.mxu0 %v1840
    %v2301 = vpop.f32.mrf.mxu0
    %v2302 = vadd.f32 %v2289, %v2301
    %v2303 = vpop.f32.mrf.mxu0
    %2304 = vdwg.mxu0
    %2305 = vmatpush.bf16.msra.mxu0 %v2146
    %2306 = vmatpush.bf16.msra.mxu0 %v2144
    %2307 = vmatpush.bf16.msra.mxu0 %v2142
    %2308 = vmatpush.bf16.msra.mxu0 %v2140
    %2309 = vmatpush.bf16.msra.mxu0 %v2138
    %2310 = vmatpush.bf16.msra.mxu0 %v2136
    %2311 = vmatpush.bf16.msra.mxu0 %v2134
    %2312 = vmatpush.bf16.msra.mxu0 %v2132
    %2313 = vmatmul.bf16.gmra.mxu0 %v1841
    %v2314 = vpop.f32.mrf.mxu0
    %v2315 = vadd.f32 %v2302, %v2314
    %v2316 = vpop.f32.mrf.mxu0
    %2317 = vdwg.mxu0
    %2318 = vmatpush.bf16.msra.mxu0 %v2162
    %2319 = vmatpush.bf16.msra.mxu0 %v2160
    %2320 = vmatpush.bf16.msra.mxu0 %v2158
    %2321 = vmatpush.bf16.msra.mxu0 %v2156
    %2322 = vmatpush.bf16.msra.mxu0 %v2154
    %2323 = vmatpush.bf16.msra.mxu0 %v2152
    %2324 = vmatpush.bf16.msra.mxu0 %v2150
    %2325 = vmatpush.bf16.msra.mxu0 %v2148
    %2326 = vmatmul.bf16.gmra.mxu0 %v1842
    %v2327 = vpop.f32.mrf.mxu0
    %v2328 = vadd.f32 %v2315, %v2327
    %v2329 = vpop.f32.mrf.mxu0
    %2330 = vdwg.mxu0
    %v2331 = vrot.slane %v2276, 4
    %v2332 = vadd.f32 %v2276, %v2331
    %v2333 = vrot.slane %v2332, 2
    %v2334 = vadd.f32 %v2332, %v2333
    %v2335 = vrot.slane %v2334, 1
    %v2336 = vadd.f32 %v2334, %v2335
    %v2337 = vrot.slane %v2328, 4
    %v2338 = vadd.f32 %v2328, %v2337
    %v2339 = vrot.slane %v2338, 2
    %v2340 = vadd.f32 %v2338, %v2339
    %v2341 = vrot.slane %v2340, 1
    %v2342 = vadd.f32 %v2340, %v2341
    %v2343 = vmul.f32 %v2336, %v1702
    %v2344 = vmul.f32 %v2342, %v1702
    %v2345 = vmul.f32 %v2276, %v2276
    %v2346 = vmul.f32 %v2328, %v2328
    %v2347 = vrot.slane %v2345, 4
    %v2348 = vadd.f32 %v2345, %v2347
    %v2349 = vrot.slane %v2348, 2
    %v2350 = vadd.f32 %v2348, %v2349
    %v2351 = vrot.slane %v2350, 1
    %v2352 = vadd.f32 %v2350, %v2351
    %v2353 = vrot.slane %v2346, 4
    %v2354 = vadd.f32 %v2346, %v2353
    %v2355 = vrot.slane %v2354, 2
    %v2356 = vadd.f32 %v2354, %v2355
    %v2357 = vrot.slane %v2356, 1
    %v2358 = vadd.f32 %v2356, %v2357
    %v2359 = vmul.f32 %v2352, %v1702
    %v2360 = vmul.f32 %v2358, %v1702
    %v2361 = vmul.f32 %v2343, %v2343
    %v2362 = vmul.f32 %v2344, %v2344
    %v2363 = vsub.f32 %v2359, %v2361
    %v2364 = vsub.f32 %v2360, %v2362
    %v2365 = vmax.f32 %v2363, 0.0
    %v2366 = vmax.f32 %v2364, 0.0
    %v2367 = vadd.f32 %v2365, 1e-05
    %v2368 = vadd.f32 %v2366, 1e-05
    %v2369 = vrsqrt.pop %v2367
    %v2370 = vmul.f32 %v2369, %v2367
    %v2371 = vmul.f32 %v2370, %v2369
    %v2372 = vmul.f32 0.5, %v2371
    %v2373 = vsub.f32 1.5, %v2372
    %v2374 = vmul.f32 %v2369, %v2373
    %vm2375 = vweird.f32 %v2367
    %vm2376 = vweird.f32 %v2369
    %vm2377 = vmor %vm2375, %vm2376
    %v2378 = vsel %vm2377, %v2369, %v2374
    %v2379 = vrsqrt.pop %v2368
    %v2380 = vmul.f32 %v2379, %v2368
    %v2381 = vmul.f32 %v2380, %v2379
    %v2382 = vmul.f32 0.5, %v2381
    %v2383 = vsub.f32 1.5, %v2382
    %v2384 = vmul.f32 %v2379, %v2383
    %vm2385 = vweird.f32 %v2368
    %vm2386 = vweird.f32 %v2379
    %vm2387 = vmor %vm2385, %vm2386
    %v2388 = vsel %vm2387, %v2379, %v2384
    %v2389 = vmul.f32 %v100, %v2378
    %v2390 = vmul.f32 %v101, %v2388
    %v2391 = vmul.f32 %v2343, %v2389
    %v2392 = vmul.f32 %v2344, %v2390
    %v2395 = vrot.slane %v2391, 7
    %v2396 = vrot.slane %v2392, 7
    %v2399 = vsub.f32 %v100, %v2395
    %v2400 = vsub.f32 %v101, %v2396
    %v2401 = vperm.slane %v2389, 2
    %v2402 = vperm.slane %v2390, 2
    %v2403 = vmul.f32 %v2276, %v2401
    %v2404 = vmul.f32 %v2328, %v2402
    %v2405 = vperm.slane %v2399, 3
    %v2406 = vperm.slane %v2400, 3
    %v2407 = vadd.f32 %v2403, %v2405
    %v2408 = vadd.f32 %v2404, %v2406
    %v2409 = vtanh.pop %v2407
    %v2410 = vtanh.pop %v2408
    %v2411 = vpack.c.bf16 %v2409, %v2409
    %v2412 = vpack.c.bf16 %v2410, %v2410
    %v2413 = vld [vmem:[#allocation8] sm:$0xf]
    %v2414 = vld [vmem:[#allocation8 + $0x4] sm:$0xf]
    %v2415 = vld [vmem:[#allocation8 + $0x8] sm:$0xf]
    %v2416 = vld [vmem:[#allocation8 + $0xc] sm:$0xf]
    %v2417 = vld [vmem:[#allocation8 + $0x10] sm:$0xf]
    %v2418 = vld [vmem:[#allocation8 + $0x14] sm:$0xf]
    %v2419 = vld [vmem:[#allocation8 + $0x18] sm:$0xf]
    %v2420 = vld [vmem:[#allocation8 + $0x1c] sm:$0xf]
    %v2421 = vld [vmem:[#allocation8 + $0x20] sm:$0xf]
    %v2422 = vld [vmem:[#allocation8 + $0x24] sm:$0xf]
    %v2423 = vld [vmem:[#allocation8 + $0x28] sm:$0xf]
    %v2424 = vld [vmem:[#allocation8 + $0x2c] sm:$0xf]
    %v2425 = vld [vmem:[#allocation8 + $0x30] sm:$0xf]
    %v2426 = vld [vmem:[#allocation8 + $0x34] sm:$0xf]
    %v2427 = vld [vmem:[#allocation8 + $0x38] sm:$0xf]
    %v2428 = vld [vmem:[#allocation8 + $0x3c] sm:$0xf]
    %v2429 = vld [vmem:[#allocation8 + $0x40] sm:$0xf]
    %v2430 = vld [vmem:[#allocation8 + $0x44] sm:$0xf]
    %v2431 = vld [vmem:[#allocation8 + $0x48] sm:$0xf]
    %v2432 = vld [vmem:[#allocation8 + $0x4c] sm:$0xf]
    %v2433 = vld [vmem:[#allocation8 + $0x50] sm:$0xf]
    %v2434 = vld [vmem:[#allocation8 + $0x54] sm:$0xf]
    %v2435 = vld [vmem:[#allocation8 + $0x58] sm:$0xf]
    %v2436 = vld [vmem:[#allocation8 + $0x5c] sm:$0xf]
    %v2437 = vld [vmem:[#allocation8 + $0x60] sm:$0xf]
    %v2438 = vld [vmem:[#allocation8 + $0x64] sm:$0xf]
    %v2439 = vld [vmem:[#allocation8 + $0x68] sm:$0xf]
    %v2440 = vld [vmem:[#allocation8 + $0x6c] sm:$0xf]
    %v2441 = vld [vmem:[#allocation8 + $0x70] sm:$0xf]
    %v2442 = vld [vmem:[#allocation8 + $0x74] sm:$0xf]
    %v2443 = vld [vmem:[#allocation8 + $0x78] sm:$0xf]
    %v2444 = vld [vmem:[#allocation8 + $0x7c] sm:$0xf]
    %v2477 = vunpack.c.l.b16 %v2413
    %v2478 = vunpack.c.l.b16 %v2414
    %v2479 = vunpack.c.l.b16 %v2415
    %v2480 = vunpack.c.l.b16 %v2416
    %v2481 = vunpack.c.l.b16 %v2417
    %v2482 = vunpack.c.l.b16 %v2418
    %v2483 = vunpack.c.l.b16 %v2419
    %v2484 = vunpack.c.l.b16 %v2420
    %v2485 = vunpack.c.l.b16 %v2421
    %v2486 = vunpack.c.l.b16 %v2422
    %v2487 = vunpack.c.l.b16 %v2423
    %v2488 = vunpack.c.l.b16 %v2424
    %v2489 = vunpack.c.l.b16 %v2425
    %v2490 = vunpack.c.l.b16 %v2426
    %v2491 = vunpack.c.l.b16 %v2427
    %v2492 = vunpack.c.l.b16 %v2428
    %v2493 = vunpack.c.l.b16 %v2429
    %v2494 = vunpack.c.l.b16 %v2430
    %v2495 = vunpack.c.l.b16 %v2431
    %v2496 = vunpack.c.l.b16 %v2432
    %v2497 = vunpack.c.l.b16 %v2433
    %v2498 = vunpack.c.l.b16 %v2434
    %v2499 = vunpack.c.l.b16 %v2435
    %v2500 = vunpack.c.l.b16 %v2436
    %v2501 = vunpack.c.l.b16 %v2437
    %v2502 = vunpack.c.l.b16 %v2438
    %v2503 = vunpack.c.l.b16 %v2439
    %v2504 = vunpack.c.l.b16 %v2440
    %v2505 = vunpack.c.l.b16 %v2441
    %v2506 = vunpack.c.l.b16 %v2442
    %v2507 = vunpack.c.l.b16 %v2443
    %v2508 = vunpack.c.l.b16 %v2444
    %v2509 = vpack.c.b16 %v2478, %v2477
    %v2510 = vpack.c.b16 %v2480, %v2479
    %v2511 = vpack.c.b16 %v2482, %v2481
    %v2512 = vpack.c.b16 %v2484, %v2483
    %v2513 = vpack.c.b16 %v2486, %v2485
    %v2514 = vpack.c.b16 %v2488, %v2487
    %v2515 = vpack.c.b16 %v2490, %v2489
    %v2516 = vpack.c.b16 %v2492, %v2491
    %v2517 = vpack.c.b16 %v2494, %v2493
    %v2518 = vpack.c.b16 %v2496, %v2495
    %v2519 = vpack.c.b16 %v2498, %v2497
    %v2520 = vpack.c.b16 %v2500, %v2499
    %v2521 = vpack.c.b16 %v2502, %v2501
    %v2522 = vpack.c.b16 %v2504, %v2503
    %v2523 = vpack.c.b16 %v2506, %v2505
    %v2524 = vpack.c.b16 %v2508, %v2507
    %2541 = vmatpush.bf16.msra.mxu0 %v2516
    %2542 = vmatpush.bf16.msra.mxu0 %v2515
    %2543 = vmatpush.bf16.msra.mxu0 %v2514
    %2544 = vmatpush.bf16.msra.mxu0 %v2513
    %2545 = vmatpush.bf16.msra.mxu0 %v2512
    %2546 = vmatpush.bf16.msra.mxu0 %v2511
    %2547 = vmatpush.bf16.msra.mxu0 %v2510
    %2548 = vmatpush.bf16.msra.mxu0 %v2509
    %2549 = vmatmul.bf16.gmra.mxu0 %v2411
    %v2550 = vpop.f32.mrf.mxu0
    %v2551 = vadd.f32 0.0, %v2550
    %v2552 = vpop.f32.mrf.mxu0
    %2553 = vdwg.mxu0
    %2554 = vmatpush.bf16.msra.mxu0 %v2524
    %2555 = vmatpush.bf16.msra.mxu0 %v2523
    %2556 = vmatpush.bf16.msra.mxu0 %v2522
    %2557 = vmatpush.bf16.msra.mxu0 %v2521
    %2558 = vmatpush.bf16.msra.mxu0 %v2520
    %2559 = vmatpush.bf16.msra.mxu0 %v2519
    %2560 = vmatpush.bf16.msra.mxu0 %v2518
    %2561 = vmatpush.bf16.msra.mxu0 %v2517
    %2562 = vmatmul.bf16.gmra.mxu0 %v2412
    %v2563 = vpop.f32.mrf.mxu0
    %v2564 = vadd.f32 %v2551, %v2563
    %v2565 = vpop.f32.mrf.mxu0
    %2566 = vdwg.mxu0
    %v2567 = vrot.slane %v2564, 4
    %v2568 = vadd.f32 %v2564, %v2567
    %v2569 = vrot.slane %v2568, 2
    %v2570 = vadd.f32 %v2568, %v2569
    %v2571 = vrot.slane %v2570, 1
    %v2572 = vadd.f32 %v2570, %v2571
    %v2573 = vmul.f32 %v2572, %v1702
    %v2574 = vmul.f32 %v2564, %v2564
    %v2575 = vrot.slane %v2574, 4
    %v2576 = vadd.f32 %v2574, %v2575
    %v2577 = vrot.slane %v2576, 2
    %v2578 = vadd.f32 %v2576, %v2577
    %v2579 = vrot.slane %v2578, 1
    %v2580 = vadd.f32 %v2578, %v2579
    %v2581 = vmul.f32 %v2580, %v1702
    %v2582 = vmul.f32 %v2573, %v2573
    %v2583 = vsub.f32 %v2581, %v2582
    %v2584 = vmax.f32 %v2583, 0.0
    %v2585 = vadd.f32 %v2584, 1e-05
    %v2586 = vrsqrt.pop %v2585
    %v2587 = vmul.f32 %v2586, %v2585
    %v2588 = vmul.f32 %v2587, %v2586
    %v2589 = vmul.f32 0.5, %v2588
    %v2590 = vsub.f32 1.5, %v2589
    %v2591 = vmul.f32 %v2586, %v2590
    %vm2592 = vweird.f32 %v2585
    %vm2593 = vweird.f32 %v2586
    %vm2594 = vmor %vm2592, %vm2593
    %v2595 = vsel %vm2594, %v2586, %v2591
    %v2596 = vmul.f32 %v100, %v2595
    %v2597 = vmul.f32 %v2573, %v2596
    %v2599 = vrot.slane %v2597, 7
    %v2601 = vsub.f32 %v100, %v2599
    %v2602 = vperm.slane %v2596, 4
    %v2603 = vmul.f32 %v2564, %v2602
    %v2604 = vperm.slane %v2601, 5
    %v2605 = vadd.f32 %v2603, %v2604
    %v2606 = vmax.f32 %v2605, 0.0
    %v2607 = vlaneseq
    %v2608 = vand.u32 %v2607, 127
    %vm2609 = vcmp.lt.s32.totalorder %v2608, 10
    %v2610 = vsel %vm2609, %v2606, -1e+30
    %2611 = vmax.xlane.f32.xlu0 %v2610
    %v2612 = vpop.xlane.xlu0 %2611
    %v2613 = vsub.f32 %v2610, %v2612
    %v2614 = vmul.f32 %v2613, 1.442695
    %v2615 = vpow.pop %v2614
    %2616 = vadd.xlane.f32.xlu0 %v2615
    %v2617 = vpop.xlane.xlu0 %2616
    %v2618 = vlog2.pop %v2617
    %v2619 = vmul.f32 %v2618, 0.6931472
    %v2620 = vadd.f32 %v2619, %v2612
    %v2621 = vsub.f32 %v2610, %v2620
    %2622 = vst [vmem:[#allocation11] sm:$0xff] %v2621
    // Predicated region
    $region42: #{tpu_custom_call.1} parent=1 // pred_check
      _
    $region43: #{tpu_custom_call.1} parent=1 // pred_check_branch
      %2624 = sbr.rel (0) target = $region45
    $region44: #{tpu_custom_call.1} parent=1 // pred_region
      %2626 = vsyncadd [#allocation4], 0
      %s2628 = sshll.u32 [#allocation11], 4
      %s2629 = int_to_ptr.vmem [resolvable:$true] %s2628
      %s2630 = sshll.u32 %s5, 4
      %s2631 = int_to_ptr.hbm [resolvable:$true] %s2630
      %2633 = dma.vmem_to_hbm [thread:$0]  %s2629, 128, %s2631, [#allocation4]
    $region45: #{tpu_custom_call.1} parent=1 // pred_fallthru
      _
    // Predicated region
    $region46: #{tpu_custom_call.1} parent=1 // pred_check
      _
    $region47: #{tpu_custom_call.1} parent=1 // pred_check_branch
      %2635 = sbr.rel (0) target = $region49
    $region48: #{tpu_custom_call.1} parent=1 // pred_region
      %2637 = dma.done [#allocation4], 128
    $region49: #{tpu_custom_call.1} parent=1 // pred_fallthru
      _
    %2638 = vsyncpa [#allocation3], 1
    %2639 = vsyncpa [#allocation6], 1
    %2640 = vsyncpa [#allocation9], 1
    %2641 = vsyncpa [#allocation4], 1

</llo_original>
